<compile_context>
chip_gen: v7x
topology: tpu7x:2x2x1
jax: 0.10.0
libtpu: 0.0.40
codegen_flags: <defaults>
</compile_context>

<pallas_src>
import functools

import numpy as np

import jax
import jax.numpy as jnp
from jax.experimental import pallas as pl
from jax.experimental.pallas import tpu as pltpu


_K, _S, _P = 5, 3, 2                      # conv_transpose kernel / stride / pad
_MIN_VALUE, _MAX_VALUE = 1.0416, 2.7782


def _round_up(v, m):
    return (v + m - 1) // m * m


def _build_tap_gather(H, W, k, s, p, m_pad):
    """Constant 0/1 gather matrices S[t] of shape (m_pad, H*W).

    S[t, ho*Wo + wo, h*W + w] == 1 iff input pixel (h, w) contributes to output
    pixel (ho, wo) through transposed-conv tap t = kh*k + kw, i.e.
    ho == h*s - p + kh  and  wo == w*s - p + kw.
    """
    Ho = (H - 1) * s - 2 * p + k
    Wo = (W - 1) * s - 2 * p + k
    S = np.zeros((k * k, m_pad, H * W), np.float32)
    for kh in range(k):
        for kw in range(k):
            t = kh * k + kw
            for ho in range(Ho):
                hn = ho + p - kh
                if hn % s != 0 or not (0 <= hn // s < H):
                    continue
                h = hn // s
                for wo in range(Wo):
                    wn = wo + p - kw
                    if wn % s != 0 or not (0 <= wn // s < W):
                        continue
                    w = wn // s
                    S[t, ho * Wo + wo, h * W + w] = 1.0
    return S, Ho, Wo


# ----------------------------------------------------------------------------
# Pallas kernel: one GEMM (bf16 operands, f32 accumulate) + bias + clamp
# ----------------------------------------------------------------------------
def _fused_gemm_kernel(x_ref, g_ref, b_ref, o_ref, *, clamp_lo, clamp_hi):
    # x_ref : (Bn, Cin*Q)            bf16, native NCHW-flattened input rows
    # g_ref : (Cin*Q, Mpad*Cpad)     bf16, fully folded conv1∘convT∘gather op
    # b_ref : (1, Mpad*Cpad)         f32, fused bias row
    # o_ref : (Bn, Mpad*Cpad)        f32, lane-dense output
    acc = jnp.dot(x_ref[...], g_ref[...], preferred_element_type=jnp.float32)
    acc = acc + b_ref[...]
    acc = jnp.minimum(jnp.maximum(acc, clamp_lo), clamp_hi)
    o_ref[...] = acc.astype(o_ref.dtype)


# ----------------------------------------------------------------------------
# Model forward (single pallas_call; all folding done at trace time under jit)
# ----------------------------------------------------------------------------
@functools.partial(jax.jit, static_argnames=("min_value", "max_value"))
def model_forward(x, params, min_value=_MIN_VALUE, max_value=_MAX_VALUE):
    w1 = params["w1"]      # (Cmid, Cin, 1, 1)  Conv2d(5, 13, 1) weight
    b1 = params["b1"]      # (Cmid,)
    wct = params["wct"]    # (Cmid, Cout, k, k) ConvTranspose2d weight layout
    bct = params["bct"]    # (Cout,)

    N, Cin, H, W = x.shape
    Cmid = w1.shape[0]
    Cout = wct.shape[1]
    k, s, p = _K, _S, _P
    T = k * k
    Q = H * W
    KQ = Cin * Q                               # GEMM contraction depth (45)

    Ho = (H - 1) * s - 2 * p + k
    Wo = (W - 1) * s - 2 * p + k
    M = Ho * Wo
    Mpad = _round_up(M, 8)                     # sublane-aligned output rows
    Cpad = _round_up(max(Cout, 128), 128)      # lane-dense output stores
    MC = Mpad * Cpad

    # --- trace-time constants: tap gather matrices + valid-tap mask ---------
    S_np, _, _ = _build_tap_gather(H, W, k, s, p, Mpad)
    tap_mask_np = S_np.sum(axis=2).T           # (Mpad, T)
    # Bias-map construction assumes at most one input pixel per (out pos, tap).
    assert np.all((tap_mask_np == 0.0) | (tap_mask_np == 1.0))
    S_const = jnp.asarray(S_np)
    tap_mask = jnp.asarray(tap_mask_np)

    hi = jax.lax.Precision.HIGHEST

    # --- fold 1x1 conv into the transposed-conv weight -----------------------
    # wf[t, ci, co] = sum_cm w1[cm, ci] * wct[cm, co, kh, kw],  t = kh*k + kw
    w1_2d = w1.reshape(Cmid, Cin)
    wf = jnp.einsum("mi,mokl->klio", w1_2d, wct, precision=hi).reshape(T, Cin, Cout)
    wf = jnp.pad(wf, ((0, 0), (0, 0), (0, Cpad - Cout)))          # (T, Cin, Cpad)

    # --- fold the constant gather S into the weights: one big operator G -----
    # G[ci*Q + q, m*Cpad + co] = sum_t S[t, m, q] * wf[t, ci, co]
    # (the ci-major ordering also folds the NCHW layout, so no input transpose)
    G = jnp.einsum("tmq,tio->iqmo", S_const, wf, precision=hi).reshape(KQ, MC)

    # --- fused bias row: bct + sum over valid taps of (b1 . wct[:,:,kh,kw]) --
    bt = jnp.einsum("m,mokl->klo", b1, wct, precision=hi).reshape(T, Cout)
    bias_map = jnp.dot(tap_mask, bt, precision=hi) + bct[None, :]  # (Mpad, Cout)
    bias_map = jnp.pad(bias_map, ((0, 0), (0, Cpad - Cout))).reshape(1, MC)
    bias_map = bias_map.astype(jnp.float32)

    # --- batch tiling: rows of up to 128, >=2 grid steps when N >= 16 --------
    if N >= 16:
        Bn = min(128, _round_up((N + 1) // 2, 8))
    else:
        Bn = _round_up(max(N, 1), 8)
    Npad = _round_up(N, Bn)
    grid_n = Npad // Bn

    # --- data path: native NCHW flatten, zero-pad rows, bf16 operands --------
    x_flat = x.reshape(N, KQ)
    x_flat = jnp.pad(x_flat, ((0, Npad - N), (0, 0))).astype(jnp.bfloat16)
    G_bf16 = G.astype(jnp.bfloat16)

    kernel = functools.partial(
        _fused_gemm_kernel,
        clamp_lo=float(min_value), clamp_hi=float(max_value))

    out_p = pl.pallas_call(
        kernel,
        out_shape=jax.ShapeDtypeStruct((Npad, MC), jnp.float32),
        grid=(grid_n,),
        in_specs=[
            pl.BlockSpec((Bn, KQ), lambda n: (n, 0)),   # batch-row tile of x
            pl.BlockSpec((KQ, MC), lambda n: (0, 0)),   # grid-invariant G
            pl.BlockSpec((1, MC), lambda n: (0, 0)),    # grid-invariant bias
        ],
        out_specs=pl.BlockSpec((Bn, MC), lambda n: (n, 0)),
        compiler_params=pltpu.CompilerParams(
            dimension_semantics=("parallel",)),
    )(x_flat, G_bf16, bias_map)

    # Wrapper-side slicing / single required transpose back to NCHW.
    out = out_p[:N].reshape(N, Mpad, Cpad)[:, :M, :Cout]
    out = out.reshape(N, Ho, Wo, Cout)
    return jnp.transpose(out, (0, 3, 1, 2))


# ----------------------------------------------------------------------------
# Pure-JAX reference (independent derivation) for correctness check
# ----------------------------------------------------------------------------
def reference_forward(x, params, min_value=_MIN_VALUE, max_value=_MAX_VALUE):
    w1, b1 = params["w1"], params["b1"]
    wct, bct = params["wct"], params["bct"]
    k, s, p = _K, _S, _P
    hi = jax.lax.Precision.HIGHEST
    v1 = jax.lax.conv_general_dilated(
        x, w1, window_strides=(1, 1), padding="VALID",
        dimension_numbers=("NCHW", "OIHW", "NCHW"), precision=hi)
    v1 = v1 + b1[None, :, None, None]
    w_flip = wct[:, :, ::-1, ::-1]                    # flip spatial
    w_oihw = jnp.transpose(w_flip, (1, 0, 2, 3))      # (Cout, Cmid, k, k)
    v2 = jax.lax.conv_general_dilated(
        v1, w_oihw, window_strides=(1, 1),
        padding=[(k - 1 - p, k - 1 - p)] * 2,
        lhs_dilation=(s, s),
        dimension_numbers=("NCHW", "OIHW", "NCHW"), precision=hi)
    v2 = v2 + bct[None, :, None, None]
    return jnp.clip(v2, min_value, max_value)


# ----------------------------------------------------------------------------
if __name__ == "__main__":
    key = jax.random.PRNGKey(0)
    k1, k2, k3, k4, kx1, kx2 = jax.random.split(key, 6)

    params = {
        "w1": jax.random.normal(k1, (13, 5, 1, 1), jnp.float32) * 0.2,
        "b1": jax.random.normal(k2, (13,), jnp.float32) * 0.1,
        "wct": jax.random.normal(k3, (13, 19, 5, 5), jnp.float32) * 0.2,
        "bct": jax.random.normal(k4, (19,), jnp.float32) * 0.1,
    }

    # Spec-shaped input (torch.randn(1, 5, 3, 3)).
    x1 = jax.random.normal(kx1, (1, 5, 3, 3), jnp.float32)
    out1 = jax.block_until_ready(model_forward(x1, params))
    assert out1.shape == (1, 19, 7, 7), out1.shape
    assert bool(jnp.all(out1 >= _MIN_VALUE - 1e-5))
    assert bool(jnp.all(out1 <= _MAX_VALUE + 1e-5))
    ref1 = jax.block_until_ready(reference_forward(x1, params))
    err1 = float(jnp.max(jnp.abs(out1 - ref1)))
    assert jnp.allclose(out1, ref1, atol=3e-2, rtol=3e-2), err1

    # Batched input — exercises the row-tiled grid (>=2 parallel steps).
    xb = jax.random.normal(kx2, (16, 5, 3, 3), jnp.float32)
    outb = jax.block_until_ready(model_forward(xb, params))
    assert outb.shape == (16, 19, 7, 7), outb.shape
    refb = jax.block_until_ready(reference_forward(xb, params))
    errb = float(jnp.max(jnp.abs(outb - refb)))
    assert jnp.allclose(outb, refb, atol=3e-2, rtol=3e-2), errb

    print("KERNEL_OK")
</pallas_src>

<mosaic_0001>
module attributes {stable_mosaic.version = 11 : i64} {
  func.func @_fused_gemm_kernel(%arg0: i32, %arg1: memref<8x45xbf16, #tpu.memory_space<vmem>>, %arg2: memref<45x7168xbf16, #tpu.memory_space<vmem>>, %arg3: memref<1x7168xf32, #tpu.memory_space<vmem>>, %arg4: memref<8x7168xf32, #tpu.memory_space<vmem>>) attributes {dimension_semantics = [#tpu.dimension_semantics<parallel>], iteration_bounds = array<i64: 1>, scalar_prefetch = 0 : i64, scratch_operands = 0 : i64, tpu.core_type = #tpu.core_type<tc>, window_params = [{transform_indices = @transform_0, window_bounds = array<i64: 8, 45>}, {pipeline_mode = #tpu.pipeline_mode<synchronous>, transform_indices = @transform_1, window_bounds = array<i64: 45, 7168>}, {pipeline_mode = #tpu.pipeline_mode<synchronous>, transform_indices = @transform_2, window_bounds = array<i64: 1, 7168>}, {transform_indices = @transform_3, window_bounds = array<i64: 8, 7168>}]} {
    %c0 = arith.constant 0 : index
    %c0_0 = arith.constant 0 : index
    %0 = vector.load %arg1[%c0, %c0_0] : memref<8x45xbf16, #tpu.memory_space<vmem>>, vector<8x45xbf16>
    %c0_1 = arith.constant 0 : index
    %c0_2 = arith.constant 0 : index
    %1 = vector.load %arg2[%c0_1, %c0_2] : memref<45x7168xbf16, #tpu.memory_space<vmem>>, vector<45x7168xbf16>
    %cst = arith.constant dense<0.000000e+00> : vector<8x7168xf32>
    %2 = tpu.matmul %0, %1, %cst {dimension_numbers = #tpu.dot_dimension_numbers<[1], [0], [0], [1], [0, 0, 1, 1], [], []>} : vector<8x45xbf16>, vector<45x7168xbf16>, vector<8x7168xf32> -> vector<8x7168xf32>
    %c0_3 = arith.constant 0 : index
    %c0_4 = arith.constant 0 : index
    %3 = vector.load %arg3[%c0_3, %c0_4] : memref<1x7168xf32, #tpu.memory_space<vmem>>, vector<1x7168xf32>
    %4 = vector.broadcast %3 : vector<1x7168xf32> to vector<8x7168xf32>
    %5 = arith.addf %2, %4 : vector<8x7168xf32>
    %cst_5 = arith.constant 1.041600e+00 : f32
    %6 = vector.broadcast %cst_5 : f32 to vector<8x7168xf32>
    %7 = arith.maximumf %5, %6 : vector<8x7168xf32>
    %cst_6 = arith.constant 2.778200e+00 : f32
    %8 = vector.broadcast %cst_6 : f32 to vector<8x7168xf32>
    %9 = arith.minimumf %7, %8 : vector<8x7168xf32>
    %c0_7 = arith.constant 0 : index
    %c0_8 = arith.constant 0 : index
    %10 = vector.load %arg4[%c0_7, %c0_8] : memref<8x7168xf32, #tpu.memory_space<vmem>>, vector<8x7168xf32>
    tpu.vector_store %arg4[%c0_7, %c0_8], %9 {strides = array<i32>} : memref<8x7168xf32, #tpu.memory_space<vmem>>, vector<8x7168xf32>,
    return
  }
  func.func @transform_0(%arg0: i32) -> (i32, i32) {
    %c0_i32 = arith.constant 0 : i32
    %c0_i32_0 = arith.constant 0 : i32
    return %arg0, %c0_i32 : i32, i32
  }
  func.func @transform_1(%arg0: i32) -> (i32, i32) {
    %c0_i32 = arith.constant 0 : i32
    %c0_i32_0 = arith.constant 0 : i32
    %c0_i32_1 = arith.constant 0 : i32
    return %c0_i32, %c0_i32_0 : i32, i32
  }
  func.func @transform_2(%arg0: i32) -> (i32, i32) {
    %c0_i32 = arith.constant 0 : i32
    %c0_i32_0 = arith.constant 0 : i32
    %c0_i32_1 = arith.constant 0 : i32
    return %c0_i32, %c0_i32_0 : i32, i32
  }
  func.func @transform_3(%arg0: i32) -> (i32, i32) {
    %c0_i32 = arith.constant 0 : i32
    %c0_i32_0 = arith.constant 0 : i32
    return %arg0, %c0_i32 : i32, i32
  }
}

</mosaic_0001>

<llo_original>
// kernel: model_forward.1
$region0: #{model_forward.1}
  #allocation0 [shape = 'u32[]', space=smem, size = 0x4, offset = 0x4, fixed_abs, tag = 'smem constant byte address 0x4 - core index']
  #allocation1 [shape = 'u32[144,128]{1,0:T(1,128)}', space=vmem, size = 0x12000, scoped, tag = 'internal scratch']
  %s0 = inlined_call_operand.vmem [shape: bf16[8,45], index: 0, kind: input, shape index: {}]
  %s1 = inlined_call_operand.vmem [shape: bf16[45,7168], index: 1, kind: input, shape index: {}]
  %s2 = inlined_call_operand.vmem [shape: f32[1,7168], index: 2, kind: input, shape index: {}]
  %s3 = inlined_call_operand.vmem [shape: f32[8,7168], index: 3, kind: output, shape index: {}]
  %s4 = sld [smem:[#allocation0]]
  $region22: #{model_forward.1} parent=0
    _
  %s6 = ssub.s32 1, %s4
  %s7 = scalar_select 0, %s6, %s4
  // Predicated region
  $region2: #{model_forward.1} parent=0 // pred_check
    _
  $region3: #{model_forward.1} parent=0 // pred_check_branch
    %9 = sbr.rel (0) target = $region5
  $region4: #{model_forward.1} parent=0 // pred_region
    _
  $region5: #{model_forward.1} parent=0 // pred_fallthru
    _
  // Predicated region
  $region6: #{model_forward.1} parent=0 // pred_check
    _
  $region7: #{model_forward.1} parent=0 // pred_check_branch
    %11 = sbr.rel (0) target = $region9
  $region8: #{model_forward.1} parent=0 // pred_region
    _
  $region9: #{model_forward.1} parent=0 // pred_fallthru
    _
  // Predicated region
  $region10: #{model_forward.1} parent=0 // pred_check
    _
  $region11: #{model_forward.1} parent=0 // pred_check_branch
    %13 = sbr.rel (0) target = $region13
  $region12: #{model_forward.1} parent=0 // pred_region
    _
  $region13: #{model_forward.1} parent=0 // pred_fallthru
    _
  %v15 = vld [vmem:[%s0] sm:$0xf]
  %v16 = vld [vmem:[%s1] sm:$0xff]
  %v17 = vld [vmem:[%s1 + $0x8] sm:$0xff]
  %v18 = vld [vmem:[%s1 + $0x10] sm:$0xff]
  %v19 = vld [vmem:[%s1 + $0x18] sm:$0xff]
  %v20 = vld [vmem:[%s1 + $0x20] sm:$0xff]
  %v21 = vld [vmem:[%s1 + $0x28] sm:$0xff]
  %v22 = vld [vmem:[%s1 + $0x30] sm:$0xff]
  %v23 = vld [vmem:[%s1 + $0x38] sm:$0xff]
  %v24 = vld [vmem:[%s1 + $0x40] sm:$0xff]
  %v25 = vld [vmem:[%s1 + $0x48] sm:$0xff]
  %v26 = vld [vmem:[%s1 + $0x50] sm:$0xff]
  %v27 = vld [vmem:[%s1 + $0x58] sm:$0xff]
  %v28 = vld [vmem:[%s1 + $0x60] sm:$0xff]
  %v29 = vld [vmem:[%s1 + $0x68] sm:$0xff]
  %v30 = vld [vmem:[%s1 + $0x70] sm:$0xff]
  %v31 = vld [vmem:[%s1 + $0x78] sm:$0xff]
  %v32 = vld [vmem:[%s1 + $0x80] sm:$0xff]
  %v33 = vld [vmem:[%s1 + $0x88] sm:$0xff]
  %v34 = vld [vmem:[%s1 + $0x90] sm:$0xff]
  %v35 = vld [vmem:[%s1 + $0x98] sm:$0xff]
  %v36 = vld [vmem:[%s1 + $0xa0] sm:$0xff]
  %v37 = vld [vmem:[%s1 + $0xa8] sm:$0xff]
  %v38 = vld [vmem:[%s1 + $0xb0] sm:$0xff]
  %v39 = vld [vmem:[%s1 + $0xb8] sm:$0xff]
  %v40 = vld [vmem:[%s1 + $0xc0] sm:$0xff]
  %v41 = vld [vmem:[%s1 + $0xc8] sm:$0xff]
  %v42 = vld [vmem:[%s1 + $0xd0] sm:$0xff]
  %v43 = vld [vmem:[%s1 + $0xd8] sm:$0xff]
  %v44 = vld [vmem:[%s1 + $0xe0] sm:$0xff]
  %v45 = vld [vmem:[%s1 + $0xe8] sm:$0xff]
  %v46 = vld [vmem:[%s1 + $0xf0] sm:$0xff]
  %v47 = vld [vmem:[%s1 + $0xf8] sm:$0xff]
  %v48 = vld [vmem:[%s1 + $0x100] sm:$0xff]
  %v49 = vld [vmem:[%s1 + $0x108] sm:$0xff]
  %v50 = vld [vmem:[%s1 + $0x110] sm:$0xff]
  %v51 = vld [vmem:[%s1 + $0x118] sm:$0xff]
  %v52 = vld [vmem:[%s1 + $0x120] sm:$0xff]
  %v53 = vld [vmem:[%s1 + $0x128] sm:$0xff]
  %v54 = vld [vmem:[%s1 + $0x130] sm:$0xff]
  %v55 = vld [vmem:[%s1 + $0x138] sm:$0xff]
  %v56 = vld [vmem:[%s1 + $0x140] sm:$0xff]
  %v57 = vld [vmem:[%s1 + $0x148] sm:$0xff]
  %v58 = vld [vmem:[%s1 + $0x150] sm:$0xff]
  %v59 = vld [vmem:[%s1 + $0x158] sm:$0xff]
  %v60 = vld [vmem:[%s1 + $0x160] sm:$0xff]
  %v61 = vld [vmem:[%s1 + $0x168] sm:$0xff]
  %v62 = vld [vmem:[%s1 + $0x170] sm:$0xff]
  %v63 = vld [vmem:[%s1 + $0x178] sm:$0xff]
  %v64 = vld [vmem:[%s1 + $0x180] sm:$0xff]
  %v65 = vld [vmem:[%s1 + $0x188] sm:$0xff]
  %v66 = vld [vmem:[%s1 + $0x190] sm:$0xff]
  %v67 = vld [vmem:[%s1 + $0x198] sm:$0xff]
  %v68 = vld [vmem:[%s1 + $0x1a0] sm:$0xff]
  %v69 = vld [vmem:[%s1 + $0x1a8] sm:$0xff]
  %v70 = vld [vmem:[%s1 + $0x1b0] sm:$0xff]
  %v71 = vld [vmem:[%s1 + $0x1b8] sm:$0xff]
  %v72 = vld [vmem:[%s1 + $0x1c0] sm:$0xff]
  %v73 = vld [vmem:[%s1 + $0x1c8] sm:$0xff]
  %v74 = vld [vmem:[%s1 + $0x1d0] sm:$0xff]
  %v75 = vld [vmem:[%s1 + $0x1d8] sm:$0xff]
  %v76 = vld [vmem:[%s1 + $0x1e0] sm:$0xff]
  %v77 = vld [vmem:[%s1 + $0x1e8] sm:$0xff]
  %v78 = vld [vmem:[%s1 + $0x1f0] sm:$0xff]
  %v79 = vld [vmem:[%s1 + $0x1f8] sm:$0xff]
  %v80 = vld [vmem:[%s1 + $0x200] sm:$0xff]
  %v81 = vld [vmem:[%s1 + $0x208] sm:$0xff]
  %v82 = vld [vmem:[%s1 + $0x210] sm:$0xff]
  %v83 = vld [vmem:[%s1 + $0x218] sm:$0xff]
  %v84 = vld [vmem:[%s1 + $0x220] sm:$0xff]
  %v85 = vld [vmem:[%s1 + $0x228] sm:$0xff]
  %v86 = vld [vmem:[%s1 + $0x230] sm:$0xff]
  %v87 = vld [vmem:[%s1 + $0x238] sm:$0xff]
  %v88 = vld [vmem:[%s1 + $0x240] sm:$0xff]
  %v89 = vld [vmem:[%s1 + $0x248] sm:$0xff]
  %v90 = vld [vmem:[%s1 + $0x250] sm:$0xff]
  %v91 = vld [vmem:[%s1 + $0x258] sm:$0xff]
  %v92 = vld [vmem:[%s1 + $0x260] sm:$0xff]
  %v93 = vld [vmem:[%s1 + $0x268] sm:$0xff]
  %v94 = vld [vmem:[%s1 + $0x270] sm:$0xff]
  %v95 = vld [vmem:[%s1 + $0x278] sm:$0xff]
  %v96 = vld [vmem:[%s1 + $0x280] sm:$0xff]
  %v97 = vld [vmem:[%s1 + $0x288] sm:$0xff]
  %v98 = vld [vmem:[%s1 + $0x290] sm:$0xff]
  %v99 = vld [vmem:[%s1 + $0x298] sm:$0xff]
  %v100 = vld [vmem:[%s1 + $0x2a0] sm:$0xff]
  %v101 = vld [vmem:[%s1 + $0x2a8] sm:$0xff]
  %v102 = vld [vmem:[%s1 + $0x2b0] sm:$0xff]
  %v103 = vld [vmem:[%s1 + $0x2b8] sm:$0xff]
  %v104 = vld [vmem:[%s1 + $0x2c0] sm:$0xff]
  %v105 = vld [vmem:[%s1 + $0x2c8] sm:$0xff]
  %v106 = vld [vmem:[%s1 + $0x2d0] sm:$0xff]
  %v107 = vld [vmem:[%s1 + $0x2d8] sm:$0xff]
  %v108 = vld [vmem:[%s1 + $0x2e0] sm:$0xff]
  %v109 = vld [vmem:[%s1 + $0x2e8] sm:$0xff]
  %v110 = vld [vmem:[%s1 + $0x2f0] sm:$0xff]
  %v111 = vld [vmem:[%s1 + $0x2f8] sm:$0xff]
  %v112 = vld [vmem:[%s1 + $0x300] sm:$0xff]
  %v113 = vld [vmem:[%s1 + $0x308] sm:$0xff]
  %v114 = vld [vmem:[%s1 + $0x310] sm:$0xff]
  %v115 = vld [vmem:[%s1 + $0x318] sm:$0xff]
  %v116 = vld [vmem:[%s1 + $0x320] sm:$0xff]
  %v117 = vld [vmem:[%s1 + $0x328] sm:$0xff]
  %v118 = vld [vmem:[%s1 + $0x330] sm:$0xff]
  %v119 = vld [vmem:[%s1 + $0x338] sm:$0xff]
  %v120 = vld [vmem:[%s1 + $0x340] sm:$0xff]
  %v121 = vld [vmem:[%s1 + $0x348] sm:$0xff]
  %v122 = vld [vmem:[%s1 + $0x350] sm:$0xff]
  %v123 = vld [vmem:[%s1 + $0x358] sm:$0xff]
  %v124 = vld [vmem:[%s1 + $0x360] sm:$0xff]
  %v125 = vld [vmem:[%s1 + $0x368] sm:$0xff]
  %v126 = vld [vmem:[%s1 + $0x370] sm:$0xff]
  %v127 = vld [vmem:[%s1 + $0x378] sm:$0xff]
  %v128 = vld [vmem:[%s1 + $0x380] sm:$0xff]
  %v129 = vld [vmem:[%s1 + $0x388] sm:$0xff]
  %v130 = vld [vmem:[%s1 + $0x390] sm:$0xff]
  %v131 = vld [vmem:[%s1 + $0x398] sm:$0xff]
  %v132 = vld [vmem:[%s1 + $0x3a0] sm:$0xff]
  %v133 = vld [vmem:[%s1 + $0x3a8] sm:$0xff]
  %v134 = vld [vmem:[%s1 + $0x3b0] sm:$0xff]
  %v135 = vld [vmem:[%s1 + $0x3b8] sm:$0xff]
  %v136 = vld [vmem:[%s1 + $0x3c0] sm:$0xff]
  %v137 = vld [vmem:[%s1 + $0x3c8] sm:$0xff]
  %v138 = vld [vmem:[%s1 + $0x3d0] sm:$0xff]
  %v139 = vld [vmem:[%s1 + $0x3d8] sm:$0xff]
  %v140 = vld [vmem:[%s1 + $0x3e0] sm:$0xff]
  %v141 = vld [vmem:[%s1 + $0x3e8] sm:$0xff]
  %v142 = vld [vmem:[%s1 + $0x3f0] sm:$0xff]
  %v143 = vld [vmem:[%s1 + $0x3f8] sm:$0xff]
  %v144 = vld [vmem:[%s1 + $0x400] sm:$0xff]
  %v145 = vld [vmem:[%s1 + $0x408] sm:$0xff]
  %v146 = vld [vmem:[%s1 + $0x410] sm:$0xff]
  %v147 = vld [vmem:[%s1 + $0x418] sm:$0xff]
  %v148 = vld [vmem:[%s1 + $0x420] sm:$0xff]
  %v149 = vld [vmem:[%s1 + $0x428] sm:$0xff]
  %v150 = vld [vmem:[%s1 + $0x430] sm:$0xff]
  %v151 = vld [vmem:[%s1 + $0x438] sm:$0xff]
  %v152 = vld [vmem:[%s1 + $0x440] sm:$0xff]
  %v153 = vld [vmem:[%s1 + $0x448] sm:$0xff]
  %v154 = vld [vmem:[%s1 + $0x450] sm:$0xff]
  %v155 = vld [vmem:[%s1 + $0x458] sm:$0xff]
  %v156 = vld [vmem:[%s1 + $0x460] sm:$0x77]
  %v157 = vld [vmem:[%s1 + $0x468] sm:$0x77]
  %v158 = vld [vmem:[%s1 + $0x470] sm:$0x77]
  %v159 = vld [vmem:[%s1 + $0x478] sm:$0x77]
  %v160 = vld [vmem:[%s1 + $0x480] sm:$0x77]
  %v161 = vld [vmem:[%s1 + $0x488] sm:$0x77]
  %v162 = vld [vmem:[%s1 + $0x490] sm:$0x77]
  %v163 = vld [vmem:[%s1 + $0x498] sm:$0x77]
  %v164 = vld [vmem:[%s1 + $0x4a0] sm:$0x77]
  %v165 = vld [vmem:[%s1 + $0x4a8] sm:$0x77]
  %v166 = vld [vmem:[%s1 + $0x4b0] sm:$0x77]
  %v167 = vld [vmem:[%s1 + $0x4b8] sm:$0x77]
  %v168 = vld [vmem:[%s1 + $0x4c0] sm:$0x77]
  %v169 = vld [vmem:[%s1 + $0x4c8] sm:$0x77]
  %v170 = vld [vmem:[%s1 + $0x4d0] sm:$0x77]
  %v171 = vld [vmem:[%s1 + $0x4d8] sm:$0x77]
  %v172 = vld [vmem:[%s1 + $0x4e0] sm:$0x77]
  %v173 = vld [vmem:[%s1 + $0x4e8] sm:$0x77]
  %v174 = vld [vmem:[%s1 + $0x4f0] sm:$0x77]
  %v175 = vld [vmem:[%s1 + $0x4f8] sm:$0x77]
  %v176 = vld [vmem:[%s1 + $0x500] sm:$0x77]
  %v177 = vld [vmem:[%s1 + $0x508] sm:$0x77]
  %v178 = vld [vmem:[%s1 + $0x510] sm:$0x77]
  %v179 = vld [vmem:[%s1 + $0x518] sm:$0x77]
  %v180 = vld [vmem:[%s1 + $0x520] sm:$0x77]
  %v181 = vld [vmem:[%s1 + $0x528] sm:$0x77]
  %v182 = vld [vmem:[%s1 + $0x530] sm:$0x77]
  %v183 = vld [vmem:[%s1 + $0x538] sm:$0x77]
  %v184 = vld [vmem:[%s2] sm:$0xff]
  %v185 = vld [vmem:[%s2 + $0x8] sm:$0xff]
  %v186 = vld [vmem:[%s2 + $0x10] sm:$0xff]
  %v187 = vld [vmem:[%s2 + $0x18] sm:$0xff]
  %v188 = vld [vmem:[%s2 + $0x20] sm:$0xff]
  %v189 = vld [vmem:[%s2 + $0x28] sm:$0xff]
  %v190 = vld [vmem:[%s2 + $0x30] sm:$0xff]
  %v198 = vlaneseq
  %v199 = vshrl.u32 %v198, 7
  %v200 = vsub.s32 0, %v199
  %v201 = vrot.slane %v184, %v200
  %v202 = vlaneseq
  %v203 = vshrl.u32 %v202, 7
  %v204 = vsub.s32 1, %v203
  %v205 = vrot.slane %v184, %v204
  %v206 = vlaneseq
  %v207 = vshrl.u32 %v206, 7
  %v208 = vsub.s32 2, %v207
  %v209 = vrot.slane %v184, %v208
  %v210 = vlaneseq
  %v211 = vshrl.u32 %v210, 7
  %v212 = vsub.s32 3, %v211
  %v213 = vrot.slane %v184, %v212
  %v214 = vlaneseq
  %v215 = vshrl.u32 %v214, 7
  %v216 = vsub.s32 4, %v215
  %v217 = vrot.slane %v184, %v216
  %v218 = vlaneseq
  %v219 = vshrl.u32 %v218, 7
  %v220 = vsub.s32 5, %v219
  %v221 = vrot.slane %v184, %v220
  %v222 = vlaneseq
  %v223 = vshrl.u32 %v222, 7
  %v224 = vsub.s32 6, %v223
  %v225 = vrot.slane %v184, %v224
  %v226 = vlaneseq
  %v227 = vshrl.u32 %v226, 7
  %v228 = vsub.s32 7, %v227
  %v229 = vrot.slane %v184, %v228
  %v230 = vlaneseq
  %v231 = vshrl.u32 %v230, 7
  %v232 = vsub.s32 0, %v231
  %v233 = vrot.slane %v185, %v232
  %v234 = vlaneseq
  %v235 = vshrl.u32 %v234, 7
  %v236 = vsub.s32 1, %v235
  %v237 = vrot.slane %v185, %v236
  %v238 = vlaneseq
  %v239 = vshrl.u32 %v238, 7
  %v240 = vsub.s32 2, %v239
  %v241 = vrot.slane %v185, %v240
  %v242 = vlaneseq
  %v243 = vshrl.u32 %v242, 7
  %v244 = vsub.s32 3, %v243
  %v245 = vrot.slane %v185, %v244
  %v246 = vlaneseq
  %v247 = vshrl.u32 %v246, 7
  %v248 = vsub.s32 4, %v247
  %v249 = vrot.slane %v185, %v248
  %v250 = vlaneseq
  %v251 = vshrl.u32 %v250, 7
  %v252 = vsub.s32 5, %v251
  %v253 = vrot.slane %v185, %v252
  %v254 = vlaneseq
  %v255 = vshrl.u32 %v254, 7
  %v256 = vsub.s32 6, %v255
  %v257 = vrot.slane %v185, %v256
  %v258 = vlaneseq
  %v259 = vshrl.u32 %v258, 7
  %v260 = vsub.s32 7, %v259
  %v261 = vrot.slane %v185, %v260
  %v262 = vlaneseq
  %v263 = vshrl.u32 %v262, 7
  %v264 = vsub.s32 0, %v263
  %v265 = vrot.slane %v186, %v264
  %v266 = vlaneseq
  %v267 = vshrl.u32 %v266, 7
  %v268 = vsub.s32 1, %v267
  %v269 = vrot.slane %v186, %v268
  %v270 = vlaneseq
  %v271 = vshrl.u32 %v270, 7
  %v272 = vsub.s32 2, %v271
  %v273 = vrot.slane %v186, %v272
  %v274 = vlaneseq
  %v275 = vshrl.u32 %v274, 7
  %v276 = vsub.s32 3, %v275
  %v277 = vrot.slane %v186, %v276
  %v278 = vlaneseq
  %v279 = vshrl.u32 %v278, 7
  %v280 = vsub.s32 4, %v279
  %v281 = vrot.slane %v186, %v280
  %v282 = vlaneseq
  %v283 = vshrl.u32 %v282, 7
  %v284 = vsub.s32 5, %v283
  %v285 = vrot.slane %v186, %v284
  %v286 = vlaneseq
  %v287 = vshrl.u32 %v286, 7
  %v288 = vsub.s32 6, %v287
  %v289 = vrot.slane %v186, %v288
  %v290 = vlaneseq
  %v291 = vshrl.u32 %v290, 7
  %v292 = vsub.s32 7, %v291
  %v293 = vrot.slane %v186, %v292
  %v294 = vlaneseq
  %v295 = vshrl.u32 %v294, 7
  %v296 = vsub.s32 0, %v295
  %v297 = vrot.slane %v187, %v296
  %v298 = vlaneseq
  %v299 = vshrl.u32 %v298, 7
  %v300 = vsub.s32 1, %v299
  %v301 = vrot.slane %v187, %v300
  %v302 = vlaneseq
  %v303 = vshrl.u32 %v302, 7
  %v304 = vsub.s32 2, %v303
  %v305 = vrot.slane %v187, %v304
  %v306 = vlaneseq
  %v307 = vshrl.u32 %v306, 7
  %v308 = vsub.s32 3, %v307
  %v309 = vrot.slane %v187, %v308
  %v310 = vlaneseq
  %v311 = vshrl.u32 %v310, 7
  %v312 = vsub.s32 4, %v311
  %v313 = vrot.slane %v187, %v312
  %v314 = vlaneseq
  %v315 = vshrl.u32 %v314, 7
  %v316 = vsub.s32 5, %v315
  %v317 = vrot.slane %v187, %v316
  %v318 = vlaneseq
  %v319 = vshrl.u32 %v318, 7
  %v320 = vsub.s32 6, %v319
  %v321 = vrot.slane %v187, %v320
  %v322 = vlaneseq
  %v323 = vshrl.u32 %v322, 7
  %v324 = vsub.s32 7, %v323
  %v325 = vrot.slane %v187, %v324
  %v326 = vlaneseq
  %v327 = vshrl.u32 %v326, 7
  %v328 = vsub.s32 0, %v327
  %v329 = vrot.slane %v188, %v328
  %v330 = vlaneseq
  %v331 = vshrl.u32 %v330, 7
  %v332 = vsub.s32 1, %v331
  %v333 = vrot.slane %v188, %v332
  %v334 = vlaneseq
  %v335 = vshrl.u32 %v334, 7
  %v336 = vsub.s32 2, %v335
  %v337 = vrot.slane %v188, %v336
  %v338 = vlaneseq
  %v339 = vshrl.u32 %v338, 7
  %v340 = vsub.s32 3, %v339
  %v341 = vrot.slane %v188, %v340
  %v342 = vlaneseq
  %v343 = vshrl.u32 %v342, 7
  %v344 = vsub.s32 4, %v343
  %v345 = vrot.slane %v188, %v344
  %v346 = vlaneseq
  %v347 = vshrl.u32 %v346, 7
  %v348 = vsub.s32 5, %v347
  %v349 = vrot.slane %v188, %v348
  %v350 = vlaneseq
  %v351 = vshrl.u32 %v350, 7
  %v352 = vsub.s32 6, %v351
  %v353 = vrot.slane %v188, %v352
  %v354 = vlaneseq
  %v355 = vshrl.u32 %v354, 7
  %v356 = vsub.s32 7, %v355
  %v357 = vrot.slane %v188, %v356
  %v358 = vlaneseq
  %v359 = vshrl.u32 %v358, 7
  %v360 = vsub.s32 0, %v359
  %v361 = vrot.slane %v189, %v360
  %v362 = vlaneseq
  %v363 = vshrl.u32 %v362, 7
  %v364 = vsub.s32 1, %v363
  %v365 = vrot.slane %v189, %v364
  %v366 = vlaneseq
  %v367 = vshrl.u32 %v366, 7
  %v368 = vsub.s32 2, %v367
  %v369 = vrot.slane %v189, %v368
  %v370 = vlaneseq
  %v371 = vshrl.u32 %v370, 7
  %v372 = vsub.s32 3, %v371
  %v373 = vrot.slane %v189, %v372
  %v374 = vlaneseq
  %v375 = vshrl.u32 %v374, 7
  %v376 = vsub.s32 4, %v375
  %v377 = vrot.slane %v189, %v376
  %v378 = vlaneseq
  %v379 = vshrl.u32 %v378, 7
  %v380 = vsub.s32 5, %v379
  %v381 = vrot.slane %v189, %v380
  %v382 = vlaneseq
  %v383 = vshrl.u32 %v382, 7
  %v384 = vsub.s32 6, %v383
  %v385 = vrot.slane %v189, %v384
  %v386 = vlaneseq
  %v387 = vshrl.u32 %v386, 7
  %v388 = vsub.s32 7, %v387
  %v389 = vrot.slane %v189, %v388
  %v390 = vlaneseq
  %v391 = vshrl.u32 %v390, 7
  %v392 = vsub.s32 0, %v391
  %v393 = vrot.slane %v190, %v392
  %v394 = vlaneseq
  %v395 = vshrl.u32 %v394, 7
  %v396 = vsub.s32 1, %v395
  %v397 = vrot.slane %v190, %v396
  %v398 = vlaneseq
  %v399 = vshrl.u32 %v398, 7
  %v400 = vsub.s32 2, %v399
  %v401 = vrot.slane %v190, %v400
  %v402 = vlaneseq
  %v403 = vshrl.u32 %v402, 7
  %v404 = vsub.s32 3, %v403
  %v405 = vrot.slane %v190, %v404
  %v406 = vlaneseq
  %v407 = vshrl.u32 %v406, 7
  %v408 = vsub.s32 4, %v407
  %v409 = vrot.slane %v190, %v408
  %v410 = vlaneseq
  %v411 = vshrl.u32 %v410, 7
  %v412 = vsub.s32 5, %v411
  %v413 = vrot.slane %v190, %v412
  %v414 = vlaneseq
  %v415 = vshrl.u32 %v414, 7
  %v416 = vsub.s32 6, %v415
  %v417 = vrot.slane %v190, %v416
  %v418 = vlaneseq
  %v419 = vshrl.u32 %v418, 7
  %v420 = vsub.s32 7, %v419
  %v421 = vrot.slane %v190, %v420
  %v646 = vunpack.c.l.b16 %v16
  %v647 = vunpack.c.h.b16 %v16
  %v648 = vunpack.c.l.b16 %v17
  %v649 = vunpack.c.h.b16 %v17
  %v650 = vunpack.c.l.b16 %v18
  %v651 = vunpack.c.h.b16 %v18
  %v652 = vunpack.c.l.b16 %v19
  %v653 = vunpack.c.h.b16 %v19
  %v654 = vunpack.c.l.b16 %v20
  %v655 = vunpack.c.h.b16 %v20
  %v656 = vunpack.c.l.b16 %v21
  %v657 = vunpack.c.h.b16 %v21
  %v658 = vunpack.c.l.b16 %v22
  %v659 = vunpack.c.h.b16 %v22
  %v660 = vunpack.c.l.b16 %v23
  %v661 = vunpack.c.h.b16 %v23
  %v662 = vunpack.c.l.b16 %v24
  %v663 = vunpack.c.h.b16 %v24
  %v664 = vunpack.c.l.b16 %v25
  %v665 = vunpack.c.h.b16 %v25
  %v666 = vunpack.c.l.b16 %v26
  %v667 = vunpack.c.h.b16 %v26
  %v668 = vunpack.c.l.b16 %v27
  %v669 = vunpack.c.h.b16 %v27
  %v670 = vunpack.c.l.b16 %v28
  %v671 = vunpack.c.h.b16 %v28
  %v672 = vunpack.c.l.b16 %v29
  %v673 = vunpack.c.h.b16 %v29
  %v674 = vunpack.c.l.b16 %v30
  %v675 = vunpack.c.h.b16 %v30
  %v676 = vunpack.c.l.b16 %v31
  %v677 = vunpack.c.h.b16 %v31
  %v678 = vunpack.c.l.b16 %v32
  %v679 = vunpack.c.h.b16 %v32
  %v680 = vunpack.c.l.b16 %v33
  %v681 = vunpack.c.h.b16 %v33
  %v682 = vunpack.c.l.b16 %v34
  %v683 = vunpack.c.h.b16 %v34
  %v684 = vunpack.c.l.b16 %v35
  %v685 = vunpack.c.h.b16 %v35
  %v686 = vunpack.c.l.b16 %v36
  %v687 = vunpack.c.h.b16 %v36
  %v688 = vunpack.c.l.b16 %v37
  %v689 = vunpack.c.h.b16 %v37
  %v690 = vunpack.c.l.b16 %v38
  %v691 = vunpack.c.h.b16 %v38
  %v692 = vunpack.c.l.b16 %v39
  %v693 = vunpack.c.h.b16 %v39
  %v694 = vunpack.c.l.b16 %v40
  %v695 = vunpack.c.h.b16 %v40
  %v696 = vunpack.c.l.b16 %v41
  %v697 = vunpack.c.h.b16 %v41
  %v698 = vunpack.c.l.b16 %v42
  %v699 = vunpack.c.h.b16 %v42
  %v700 = vunpack.c.l.b16 %v43
  %v701 = vunpack.c.h.b16 %v43
  %v702 = vunpack.c.l.b16 %v44
  %v703 = vunpack.c.h.b16 %v44
  %v704 = vunpack.c.l.b16 %v45
  %v705 = vunpack.c.h.b16 %v45
  %v706 = vunpack.c.l.b16 %v46
  %v707 = vunpack.c.h.b16 %v46
  %v708 = vunpack.c.l.b16 %v47
  %v709 = vunpack.c.h.b16 %v47
  %v710 = vunpack.c.l.b16 %v48
  %v711 = vunpack.c.h.b16 %v48
  %v712 = vunpack.c.l.b16 %v49
  %v713 = vunpack.c.h.b16 %v49
  %v714 = vunpack.c.l.b16 %v50
  %v715 = vunpack.c.h.b16 %v50
  %v716 = vunpack.c.l.b16 %v51
  %v717 = vunpack.c.h.b16 %v51
  %v718 = vunpack.c.l.b16 %v52
  %v719 = vunpack.c.h.b16 %v52
  %v720 = vunpack.c.l.b16 %v53
  %v721 = vunpack.c.h.b16 %v53
  %v722 = vunpack.c.l.b16 %v54
  %v723 = vunpack.c.h.b16 %v54
  %v724 = vunpack.c.l.b16 %v55
  %v725 = vunpack.c.h.b16 %v55
  %v726 = vunpack.c.l.b16 %v56
  %v727 = vunpack.c.h.b16 %v56
  %v728 = vunpack.c.l.b16 %v57
  %v729 = vunpack.c.h.b16 %v57
  %v730 = vunpack.c.l.b16 %v58
  %v731 = vunpack.c.h.b16 %v58
  %v732 = vunpack.c.l.b16 %v59
  %v733 = vunpack.c.h.b16 %v59
  %v734 = vunpack.c.l.b16 %v60
  %v735 = vunpack.c.h.b16 %v60
  %v736 = vunpack.c.l.b16 %v61
  %v737 = vunpack.c.h.b16 %v61
  %v738 = vunpack.c.l.b16 %v62
  %v739 = vunpack.c.h.b16 %v62
  %v740 = vunpack.c.l.b16 %v63
  %v741 = vunpack.c.h.b16 %v63
  %v742 = vunpack.c.l.b16 %v64
  %v743 = vunpack.c.h.b16 %v64
  %v744 = vunpack.c.l.b16 %v65
  %v745 = vunpack.c.h.b16 %v65
  %v746 = vunpack.c.l.b16 %v66
  %v747 = vunpack.c.h.b16 %v66
  %v748 = vunpack.c.l.b16 %v67
  %v749 = vunpack.c.h.b16 %v67
  %v750 = vunpack.c.l.b16 %v68
  %v751 = vunpack.c.h.b16 %v68
  %v752 = vunpack.c.l.b16 %v69
  %v753 = vunpack.c.h.b16 %v69
  %v754 = vunpack.c.l.b16 %v70
  %v755 = vunpack.c.h.b16 %v70
  %v756 = vunpack.c.l.b16 %v71
  %v757 = vunpack.c.h.b16 %v71
  %v758 = vunpack.c.l.b16 %v72
  %v759 = vunpack.c.h.b16 %v72
  %v760 = vunpack.c.l.b16 %v73
  %v761 = vunpack.c.h.b16 %v73
  %v762 = vunpack.c.l.b16 %v74
  %v763 = vunpack.c.h.b16 %v74
  %v764 = vunpack.c.l.b16 %v75
  %v765 = vunpack.c.h.b16 %v75
  %v766 = vunpack.c.l.b16 %v76
  %v767 = vunpack.c.h.b16 %v76
  %v768 = vunpack.c.l.b16 %v77
  %v769 = vunpack.c.h.b16 %v77
  %v770 = vunpack.c.l.b16 %v78
  %v771 = vunpack.c.h.b16 %v78
  %v772 = vunpack.c.l.b16 %v79
  %v773 = vunpack.c.h.b16 %v79
  %v774 = vunpack.c.l.b16 %v80
  %v775 = vunpack.c.h.b16 %v80
  %v776 = vunpack.c.l.b16 %v81
  %v777 = vunpack.c.h.b16 %v81
  %v778 = vunpack.c.l.b16 %v82
  %v779 = vunpack.c.h.b16 %v82
  %v780 = vunpack.c.l.b16 %v83
  %v781 = vunpack.c.h.b16 %v83
  %v782 = vunpack.c.l.b16 %v84
  %v783 = vunpack.c.h.b16 %v84
  %v784 = vunpack.c.l.b16 %v85
  %v785 = vunpack.c.h.b16 %v85
  %v786 = vunpack.c.l.b16 %v86
  %v787 = vunpack.c.h.b16 %v86
  %v788 = vunpack.c.l.b16 %v87
  %v789 = vunpack.c.h.b16 %v87
  %v790 = vunpack.c.l.b16 %v88
  %v791 = vunpack.c.h.b16 %v88
  %v792 = vunpack.c.l.b16 %v89
  %v793 = vunpack.c.h.b16 %v89
  %v794 = vunpack.c.l.b16 %v90
  %v795 = vunpack.c.h.b16 %v90
  %v796 = vunpack.c.l.b16 %v91
  %v797 = vunpack.c.h.b16 %v91
  %v798 = vunpack.c.l.b16 %v92
  %v799 = vunpack.c.h.b16 %v92
  %v800 = vunpack.c.l.b16 %v93
  %v801 = vunpack.c.h.b16 %v93
  %v802 = vunpack.c.l.b16 %v94
  %v803 = vunpack.c.h.b16 %v94
  %v804 = vunpack.c.l.b16 %v95
  %v805 = vunpack.c.h.b16 %v95
  %v806 = vunpack.c.l.b16 %v96
  %v807 = vunpack.c.h.b16 %v96
  %v808 = vunpack.c.l.b16 %v97
  %v809 = vunpack.c.h.b16 %v97
  %v810 = vunpack.c.l.b16 %v98
  %v811 = vunpack.c.h.b16 %v98
  %v812 = vunpack.c.l.b16 %v99
  %v813 = vunpack.c.h.b16 %v99
  %v814 = vunpack.c.l.b16 %v100
  %v815 = vunpack.c.h.b16 %v100
  %v816 = vunpack.c.l.b16 %v101
  %v817 = vunpack.c.h.b16 %v101
  %v818 = vunpack.c.l.b16 %v102
  %v819 = vunpack.c.h.b16 %v102
  %v820 = vunpack.c.l.b16 %v103
  %v821 = vunpack.c.h.b16 %v103
  %v822 = vunpack.c.l.b16 %v104
  %v823 = vunpack.c.h.b16 %v104
  %v824 = vunpack.c.l.b16 %v105
  %v825 = vunpack.c.h.b16 %v105
  %v826 = vunpack.c.l.b16 %v106
  %v827 = vunpack.c.h.b16 %v106
  %v828 = vunpack.c.l.b16 %v107
  %v829 = vunpack.c.h.b16 %v107
  %v830 = vunpack.c.l.b16 %v108
  %v831 = vunpack.c.h.b16 %v108
  %v832 = vunpack.c.l.b16 %v109
  %v833 = vunpack.c.h.b16 %v109
  %v834 = vunpack.c.l.b16 %v110
  %v835 = vunpack.c.h.b16 %v110
  %v836 = vunpack.c.l.b16 %v111
  %v837 = vunpack.c.h.b16 %v111
  %v838 = vunpack.c.l.b16 %v112
  %v839 = vunpack.c.h.b16 %v112
  %v840 = vunpack.c.l.b16 %v113
  %v841 = vunpack.c.h.b16 %v113
  %v842 = vunpack.c.l.b16 %v114
  %v843 = vunpack.c.h.b16 %v114
  %v844 = vunpack.c.l.b16 %v115
  %v845 = vunpack.c.h.b16 %v115
  %v846 = vunpack.c.l.b16 %v116
  %v847 = vunpack.c.h.b16 %v116
  %v848 = vunpack.c.l.b16 %v117
  %v849 = vunpack.c.h.b16 %v117
  %v850 = vunpack.c.l.b16 %v118
  %v851 = vunpack.c.h.b16 %v118
  %v852 = vunpack.c.l.b16 %v119
  %v853 = vunpack.c.h.b16 %v119
  %v854 = vunpack.c.l.b16 %v120
  %v855 = vunpack.c.h.b16 %v120
  %v856 = vunpack.c.l.b16 %v121
  %v857 = vunpack.c.h.b16 %v121
  %v858 = vunpack.c.l.b16 %v122
  %v859 = vunpack.c.h.b16 %v122
  %v860 = vunpack.c.l.b16 %v123
  %v861 = vunpack.c.h.b16 %v123
  %v862 = vunpack.c.l.b16 %v124
  %v863 = vunpack.c.h.b16 %v124
  %v864 = vunpack.c.l.b16 %v125
  %v865 = vunpack.c.h.b16 %v125
  %v866 = vunpack.c.l.b16 %v126
  %v867 = vunpack.c.h.b16 %v126
  %v868 = vunpack.c.l.b16 %v127
  %v869 = vunpack.c.h.b16 %v127
  %v870 = vunpack.c.l.b16 %v128
  %v871 = vunpack.c.h.b16 %v128
  %v872 = vunpack.c.l.b16 %v129
  %v873 = vunpack.c.h.b16 %v129
  %v874 = vunpack.c.l.b16 %v130
  %v875 = vunpack.c.h.b16 %v130
  %v876 = vunpack.c.l.b16 %v131
  %v877 = vunpack.c.h.b16 %v131
  %v878 = vunpack.c.l.b16 %v132
  %v879 = vunpack.c.h.b16 %v132
  %v880 = vunpack.c.l.b16 %v133
  %v881 = vunpack.c.h.b16 %v133
  %v882 = vunpack.c.l.b16 %v134
  %v883 = vunpack.c.h.b16 %v134
  %v884 = vunpack.c.l.b16 %v135
  %v885 = vunpack.c.h.b16 %v135
  %v886 = vunpack.c.l.b16 %v136
  %v887 = vunpack.c.h.b16 %v136
  %v888 = vunpack.c.l.b16 %v137
  %v889 = vunpack.c.h.b16 %v137
  %v890 = vunpack.c.l.b16 %v138
  %v891 = vunpack.c.h.b16 %v138
  %v892 = vunpack.c.l.b16 %v139
  %v893 = vunpack.c.h.b16 %v139
  %v894 = vunpack.c.l.b16 %v140
  %v895 = vunpack.c.h.b16 %v140
  %v896 = vunpack.c.l.b16 %v141
  %v897 = vunpack.c.h.b16 %v141
  %v898 = vunpack.c.l.b16 %v142
  %v899 = vunpack.c.h.b16 %v142
  %v900 = vunpack.c.l.b16 %v143
  %v901 = vunpack.c.h.b16 %v143
  %v902 = vunpack.c.l.b16 %v144
  %v903 = vunpack.c.h.b16 %v144
  %v904 = vunpack.c.l.b16 %v145
  %v905 = vunpack.c.h.b16 %v145
  %v906 = vunpack.c.l.b16 %v146
  %v907 = vunpack.c.h.b16 %v146
  %v908 = vunpack.c.l.b16 %v147
  %v909 = vunpack.c.h.b16 %v147
  %v910 = vunpack.c.l.b16 %v148
  %v911 = vunpack.c.h.b16 %v148
  %v912 = vunpack.c.l.b16 %v149
  %v913 = vunpack.c.h.b16 %v149
  %v914 = vunpack.c.l.b16 %v150
  %v915 = vunpack.c.h.b16 %v150
  %v916 = vunpack.c.l.b16 %v151
  %v917 = vunpack.c.h.b16 %v151
  %v918 = vunpack.c.l.b16 %v152
  %v919 = vunpack.c.h.b16 %v152
  %v920 = vunpack.c.l.b16 %v153
  %v921 = vunpack.c.h.b16 %v153
  %v922 = vunpack.c.l.b16 %v154
  %v923 = vunpack.c.h.b16 %v154
  %v924 = vunpack.c.l.b16 %v155
  %v925 = vunpack.c.h.b16 %v155
  %v926 = vunpack.c.l.b16 %v156
  %v927 = vunpack.c.h.b16 %v156
  %v928 = vunpack.c.l.b16 %v157
  %v929 = vunpack.c.h.b16 %v157
  %v930 = vunpack.c.l.b16 %v158
  %v931 = vunpack.c.h.b16 %v158
  %v932 = vunpack.c.l.b16 %v159
  %v933 = vunpack.c.h.b16 %v159
  %v934 = vunpack.c.l.b16 %v160
  %v935 = vunpack.c.h.b16 %v160
  %v936 = vunpack.c.l.b16 %v161
  %v937 = vunpack.c.h.b16 %v161
  %v938 = vunpack.c.l.b16 %v162
  %v939 = vunpack.c.h.b16 %v162
  %v940 = vunpack.c.l.b16 %v163
  %v941 = vunpack.c.h.b16 %v163
  %v942 = vunpack.c.l.b16 %v164
  %v943 = vunpack.c.h.b16 %v164
  %v944 = vunpack.c.l.b16 %v165
  %v945 = vunpack.c.h.b16 %v165
  %v946 = vunpack.c.l.b16 %v166
  %v947 = vunpack.c.h.b16 %v166
  %v948 = vunpack.c.l.b16 %v167
  %v949 = vunpack.c.h.b16 %v167
  %v950 = vunpack.c.l.b16 %v168
  %v951 = vunpack.c.h.b16 %v168
  %v952 = vunpack.c.l.b16 %v169
  %v953 = vunpack.c.h.b16 %v169
  %v954 = vunpack.c.l.b16 %v170
  %v955 = vunpack.c.h.b16 %v170
  %v956 = vunpack.c.l.b16 %v171
  %v957 = vunpack.c.h.b16 %v171
  %v958 = vunpack.c.l.b16 %v172
  %v959 = vunpack.c.h.b16 %v172
  %v960 = vunpack.c.l.b16 %v173
  %v961 = vunpack.c.h.b16 %v173
  %v962 = vunpack.c.l.b16 %v174
  %v963 = vunpack.c.h.b16 %v174
  %v964 = vunpack.c.l.b16 %v175
  %v965 = vunpack.c.h.b16 %v175
  %v966 = vunpack.c.l.b16 %v176
  %v967 = vunpack.c.h.b16 %v176
  %v968 = vunpack.c.l.b16 %v177
  %v969 = vunpack.c.h.b16 %v177
  %v970 = vunpack.c.l.b16 %v178
  %v971 = vunpack.c.h.b16 %v178
  %v972 = vunpack.c.l.b16 %v179
  %v973 = vunpack.c.h.b16 %v179
  %v974 = vunpack.c.l.b16 %v180
  %v975 = vunpack.c.h.b16 %v180
  %v976 = vunpack.c.l.b16 %v181
  %v977 = vunpack.c.h.b16 %v181
  %v978 = vunpack.c.l.b16 %v182
  %v979 = vunpack.c.h.b16 %v182
  %v980 = vunpack.c.l.b16 %v183
  %v981 = vunpack.c.h.b16 %v183
  %v982 = vpack.c.b16 %v702, %v646
  %v983 = vpack.c.b16 %v703, %v647
  %v984 = vpack.c.b16 %v704, %v648
  %v985 = vpack.c.b16 %v705, %v649
  %v986 = vpack.c.b16 %v706, %v650
  %v987 = vpack.c.b16 %v707, %v651
  %v988 = vpack.c.b16 %v708, %v652
  %v989 = vpack.c.b16 %v709, %v653
  %v990 = vpack.c.b16 %v710, %v654
  %v991 = vpack.c.b16 %v711, %v655
  %v992 = vpack.c.b16 %v712, %v656
  %v993 = vpack.c.b16 %v713, %v657
  %v994 = vpack.c.b16 %v714, %v658
  %v995 = vpack.c.b16 %v715, %v659
  %v996 = vpack.c.b16 %v716, %v660
  %v997 = vpack.c.b16 %v717, %v661
  %v998 = vpack.c.b16 %v718, %v662
  %v999 = vpack.c.b16 %v719, %v663
  %v1000 = vpack.c.b16 %v720, %v664
  %v1001 = vpack.c.b16 %v721, %v665
  %v1002 = vpack.c.b16 %v722, %v666
  %v1003 = vpack.c.b16 %v723, %v667
  %v1004 = vpack.c.b16 %v724, %v668
  %v1005 = vpack.c.b16 %v725, %v669
  %v1006 = vpack.c.b16 %v726, %v670
  %v1007 = vpack.c.b16 %v727, %v671
  %v1008 = vpack.c.b16 %v728, %v672
  %v1009 = vpack.c.b16 %v729, %v673
  %v1010 = vpack.c.b16 %v730, %v674
  %v1011 = vpack.c.b16 %v731, %v675
  %v1012 = vpack.c.b16 %v732, %v676
  %v1013 = vpack.c.b16 %v733, %v677
  %v1014 = vpack.c.b16 %v734, %v678
  %v1015 = vpack.c.b16 %v735, %v679
  %v1016 = vpack.c.b16 %v736, %v680
  %v1017 = vpack.c.b16 %v737, %v681
  %v1018 = vpack.c.b16 %v738, %v682
  %v1019 = vpack.c.b16 %v739, %v683
  %v1020 = vpack.c.b16 %v740, %v684
  %v1021 = vpack.c.b16 %v741, %v685
  %v1022 = vpack.c.b16 %v742, %v686
  %v1023 = vpack.c.b16 %v743, %v687
  %v1024 = vpack.c.b16 %v744, %v688
  %v1025 = vpack.c.b16 %v745, %v689
  %v1026 = vpack.c.b16 %v746, %v690
  %v1027 = vpack.c.b16 %v747, %v691
  %v1028 = vpack.c.b16 %v748, %v692
  %v1029 = vpack.c.b16 %v749, %v693
  %v1030 = vpack.c.b16 %v750, %v694
  %v1031 = vpack.c.b16 %v751, %v695
  %v1032 = vpack.c.b16 %v752, %v696
  %v1033 = vpack.c.b16 %v753, %v697
  %v1034 = vpack.c.b16 %v754, %v698
  %v1035 = vpack.c.b16 %v755, %v699
  %v1036 = vpack.c.b16 %v756, %v700
  %v1037 = vpack.c.b16 %v757, %v701
  %v1038 = vpack.c.b16 %v814, %v758
  %v1039 = vpack.c.b16 %v815, %v759
  %v1040 = vpack.c.b16 %v816, %v760
  %v1041 = vpack.c.b16 %v817, %v761
  %v1042 = vpack.c.b16 %v818, %v762
  %v1043 = vpack.c.b16 %v819, %v763
  %v1044 = vpack.c.b16 %v820, %v764
  %v1045 = vpack.c.b16 %v821, %v765
  %v1046 = vpack.c.b16 %v822, %v766
  %v1047 = vpack.c.b16 %v823, %v767
  %v1048 = vpack.c.b16 %v824, %v768
  %v1049 = vpack.c.b16 %v825, %v769
  %v1050 = vpack.c.b16 %v826, %v770
  %v1051 = vpack.c.b16 %v827, %v771
  %v1052 = vpack.c.b16 %v828, %v772
  %v1053 = vpack.c.b16 %v829, %v773
  %v1054 = vpack.c.b16 %v830, %v774
  %v1055 = vpack.c.b16 %v831, %v775
  %v1056 = vpack.c.b16 %v832, %v776
  %v1057 = vpack.c.b16 %v833, %v777
  %v1058 = vpack.c.b16 %v834, %v778
  %v1059 = vpack.c.b16 %v835, %v779
  %v1060 = vpack.c.b16 %v836, %v780
  %v1061 = vpack.c.b16 %v837, %v781
  %v1062 = vpack.c.b16 %v838, %v782
  %v1063 = vpack.c.b16 %v839, %v783
  %v1064 = vpack.c.b16 %v840, %v784
  %v1065 = vpack.c.b16 %v841, %v785
  %v1066 = vpack.c.b16 %v842, %v786
  %v1067 = vpack.c.b16 %v843, %v787
  %v1068 = vpack.c.b16 %v844, %v788
  %v1069 = vpack.c.b16 %v845, %v789
  %v1070 = vpack.c.b16 %v846, %v790
  %v1071 = vpack.c.b16 %v847, %v791
  %v1072 = vpack.c.b16 %v848, %v792
  %v1073 = vpack.c.b16 %v849, %v793
  %v1074 = vpack.c.b16 %v850, %v794
  %v1075 = vpack.c.b16 %v851, %v795
  %v1076 = vpack.c.b16 %v852, %v796
  %v1077 = vpack.c.b16 %v853, %v797
  %v1078 = vpack.c.b16 %v854, %v798
  %v1079 = vpack.c.b16 %v855, %v799
  %v1080 = vpack.c.b16 %v856, %v800
  %v1081 = vpack.c.b16 %v857, %v801
  %v1082 = vpack.c.b16 %v858, %v802
  %v1083 = vpack.c.b16 %v859, %v803
  %v1084 = vpack.c.b16 %v860, %v804
  %v1085 = vpack.c.b16 %v861, %v805
  %v1086 = vpack.c.b16 %v862, %v806
  %v1087 = vpack.c.b16 %v863, %v807
  %v1088 = vpack.c.b16 %v864, %v808
  %v1089 = vpack.c.b16 %v865, %v809
  %v1090 = vpack.c.b16 %v866, %v810
  %v1091 = vpack.c.b16 %v867, %v811
  %v1092 = vpack.c.b16 %v868, %v812
  %v1093 = vpack.c.b16 %v869, %v813
  %v1094 = vpack.c.b16 %v926, %v870
  %v1095 = vpack.c.b16 %v927, %v871
  %v1096 = vpack.c.b16 %v928, %v872
  %v1097 = vpack.c.b16 %v929, %v873
  %v1098 = vpack.c.b16 %v930, %v874
  %v1099 = vpack.c.b16 %v931, %v875
  %v1100 = vpack.c.b16 %v932, %v876
  %v1101 = vpack.c.b16 %v933, %v877
  %v1102 = vpack.c.b16 %v934, %v878
  %v1103 = vpack.c.b16 %v935, %v879
  %v1104 = vpack.c.b16 %v936, %v880
  %v1105 = vpack.c.b16 %v937, %v881
  %v1106 = vpack.c.b16 %v938, %v882
  %v1107 = vpack.c.b16 %v939, %v883
  %v1108 = vpack.c.b16 %v940, %v884
  %v1109 = vpack.c.b16 %v941, %v885
  %v1110 = vpack.c.b16 %v942, %v886
  %v1111 = vpack.c.b16 %v943, %v887
  %v1112 = vpack.c.b16 %v944, %v888
  %v1113 = vpack.c.b16 %v945, %v889
  %v1114 = vpack.c.b16 %v946, %v890
  %v1115 = vpack.c.b16 %v947, %v891
  %v1116 = vpack.c.b16 %v948, %v892
  %v1117 = vpack.c.b16 %v949, %v893
  %v1118 = vpack.c.b16 %v950, %v894
  %v1119 = vpack.c.b16 %v951, %v895
  %v1120 = vpack.c.b16 %v952, %v896
  %v1121 = vpack.c.b16 %v953, %v897
  %v1122 = vpack.c.b16 %v954, %v898
  %v1123 = vpack.c.b16 %v955, %v899
  %v1124 = vpack.c.b16 %v956, %v900
  %v1125 = vpack.c.b16 %v957, %v901
  %v1126 = vpack.c.b16 %v958, %v902
  %v1127 = vpack.c.b16 %v959, %v903
  %v1128 = vpack.c.b16 %v960, %v904
  %v1129 = vpack.c.b16 %v961, %v905
  %v1130 = vpack.c.b16 %v962, %v906
  %v1131 = vpack.c.b16 %v963, %v907
  %v1132 = vpack.c.b16 %v964, %v908
  %v1133 = vpack.c.b16 %v965, %v909
  %v1134 = vpack.c.b16 %v966, %v910
  %v1135 = vpack.c.b16 %v967, %v911
  %v1136 = vpack.c.b16 %v968, %v912
  %v1137 = vpack.c.b16 %v969, %v913
  %v1138 = vpack.c.b16 %v970, %v914
  %v1139 = vpack.c.b16 %v971, %v915
  %v1140 = vpack.c.b16 %v972, %v916
  %v1141 = vpack.c.b16 %v973, %v917
  %v1142 = vpack.c.b16 %v974, %v918
  %v1143 = vpack.c.b16 %v975, %v919
  %v1144 = vpack.c.b16 %v976, %v920
  %v1145 = vpack.c.b16 %v977, %v921
  %v1146 = vpack.c.b16 %v978, %v922
  %v1147 = vpack.c.b16 %v979, %v923
  %v1148 = vpack.c.b16 %v980, %v924
  %v1149 = vpack.c.b16 %v981, %v925
  %vm1262 = vcmask 367616
  %v1264 = vsel %vm1262, %v15, 0
  %vm1266 = vcmask 1045504
  %vm1267 = vcmask 1046528
  %v1268 = vsel %vm1266, 4294967295, 65535
  %v1269 = vsel %vm1267, %v1268, 0
  %v1271 = vand.u32 %v1094, %v1269
  %v1274 = vand.u32 %v1095, %v1269
  %v1277 = vand.u32 %v1096, %v1269
  %v1280 = vand.u32 %v1097, %v1269
  %v1283 = vand.u32 %v1098, %v1269
  %v1286 = vand.u32 %v1099, %v1269
  %v1289 = vand.u32 %v1100, %v1269
  %v1292 = vand.u32 %v1101, %v1269
  %v1295 = vand.u32 %v1102, %v1269
  %v1298 = vand.u32 %v1103, %v1269
  %v1301 = vand.u32 %v1104, %v1269
  %v1304 = vand.u32 %v1105, %v1269
  %v1307 = vand.u32 %v1106, %v1269
  %v1310 = vand.u32 %v1107, %v1269
  %v1313 = vand.u32 %v1108, %v1269
  %v1316 = vand.u32 %v1109, %v1269
  %v1319 = vand.u32 %v1110, %v1269
  %v1322 = vand.u32 %v1111, %v1269
  %v1325 = vand.u32 %v1112, %v1269
  %v1328 = vand.u32 %v1113, %v1269
  %v1331 = vand.u32 %v1114, %v1269
  %v1334 = vand.u32 %v1115, %v1269
  %v1337 = vand.u32 %v1116, %v1269
  %v1340 = vand.u32 %v1117, %v1269
  %v1343 = vand.u32 %v1118, %v1269
  %v1346 = vand.u32 %v1119, %v1269
  %v1349 = vand.u32 %v1120, %v1269
  %v1352 = vand.u32 %v1121, %v1269
  %v1355 = vand.u32 %v1122, %v1269
  %v1358 = vand.u32 %v1123, %v1269
  %v1361 = vand.u32 %v1124, %v1269
  %v1364 = vand.u32 %v1125, %v1269
  %v1367 = vand.u32 %v1126, %v1269
  %v1370 = vand.u32 %v1127, %v1269
  %v1373 = vand.u32 %v1128, %v1269
  %v1376 = vand.u32 %v1129, %v1269
  %v1379 = vand.u32 %v1130, %v1269
  %v1382 = vand.u32 %v1131, %v1269
  %v1385 = vand.u32 %v1132, %v1269
  %v1388 = vand.u32 %v1133, %v1269
  %v1391 = vand.u32 %v1134, %v1269
  %v1394 = vand.u32 %v1135, %v1269
  %v1397 = vand.u32 %v1136, %v1269
  %v1400 = vand.u32 %v1137, %v1269
  %v1403 = vand.u32 %v1138, %v1269
  %v1406 = vand.u32 %v1139, %v1269
  %v1409 = vand.u32 %v1140, %v1269
  %v1412 = vand.u32 %v1141, %v1269
  %v1415 = vand.u32 %v1142, %v1269
  %v1418 = vand.u32 %v1143, %v1269
  %v1421 = vand.u32 %v1144, %v1269
  %v1424 = vand.u32 %v1145, %v1269
  %v1427 = vand.u32 %v1146, %v1269
  %v1430 = vand.u32 %v1147, %v1269
  %v1433 = vand.u32 %v1148, %v1269
  %v1436 = vand.u32 %v1149, %v1269
  %1438 = vmatprep.subr.bf16.mxu0 %v983
  %1439 = vmatpush1.bf16.msra.mxu0 %v982
  %1440 = vmatprep.subr.bf16.mxu0 %v1039
  %1441 = vmatpush1.bf16.msra.mxu0 %v1038
  %1442 = vmatprep.subr.bf16.mxu0 %v1274
  %1443 = vmatpush1.bf16.msra.mxu0 %v1271
  %1444 = vmatprep.subr.bf16.mxu0 0
  %1445 = vmatpush1.bf16.msra.mxu0 0
  %1446 = vmatprep.subr.bf16.mxu0 0
  %1447 = vmatpush1.bf16.msra.mxu0 0
  %1448 = vmatprep.subr.bf16.mxu0 0
  %1449 = vmatpush1.bf16.msra.mxu0 0
  %1450 = vmatprep.subr.bf16.mxu0 0
  %1451 = vmatpush1.bf16.msra.mxu0 0
  %1452 = vmatprep.subr.bf16.mxu0 0
  %1453 = vmatpush1.bf16.msra.mxu0 0
  %1454 = vmatprep.subr.bf16.mxu0 0
  %1455 = vmatpush1.bf16.msra.mxu0 0
  %1456 = vmatprep.subr.bf16.mxu0 0
  %1457 = vmatpush1.bf16.msra.mxu0 0
  %1458 = vmatprep.subr.bf16.mxu0 0
  %1459 = vmatpush1.bf16.msra.mxu0 0
  %1460 = vmatprep.subr.bf16.mxu0 0
  %1461 = vmatpush1.bf16.msra.mxu0 0
  %1462 = vmatprep.subr.bf16.mxu0 0
  %1463 = vmatpush1.bf16.msra.mxu0 0
  %1464 = vmatprep.subr.bf16.mxu0 0
  %1465 = vmatpush1.bf16.msra.mxu0 0
  %1466 = vmatprep.subr.bf16.mxu0 0
  %1467 = vmatpush1.bf16.msra.mxu0 0
  %1468 = vmatprep.subr.bf16.mxu0 0
  %1469 = vmatpush1.bf16.msra.mxu0 0
  %1470 = vmatprep.mubr.bf16.mxu0 0
  %1471 = vmatmul.mubr.bf16.gmra.mrb[0].mxu0 %v1264
  %v1472 = vpop.f32.mrb[0].mxu0
  %v1473 = vadd.f32 %v201, %v1472
  %v1474 = vpop.f32.mrb[0].mxu0
  %v1475 = vadd.f32 %v205, %v1474
  %v1476 = vpop.f32.mrb[0].mxu0
  %v1477 = vpop.f32.mrb[0].mxu0
  %1478 = vdwg.mxu0
  %1479 = vmatprep.subr.bf16.mxu0 %v985
  %1480 = vmatpush1.bf16.msra.mxu0 %v984
  %1481 = vmatprep.subr.bf16.mxu0 %v1041
  %1482 = vmatpush1.bf16.msra.mxu0 %v1040
  %1483 = vmatprep.subr.bf16.mxu0 %v1280
  %1484 = vmatpush1.bf16.msra.mxu0 %v1277
  %1485 = vmatprep.subr.bf16.mxu0 0
  %1486 = vmatpush1.bf16.msra.mxu0 0
  %1487 = vmatprep.subr.bf16.mxu0 0
  %1488 = vmatpush1.bf16.msra.mxu0 0
  %1489 = vmatprep.subr.bf16.mxu0 0
  %1490 = vmatpush1.bf16.msra.mxu0 0
  %1491 = vmatprep.subr.bf16.mxu0 0
  %1492 = vmatpush1.bf16.msra.mxu0 0
  %1493 = vmatprep.subr.bf16.mxu0 0
  %1494 = vmatpush1.bf16.msra.mxu0 0
  %1495 = vmatprep.subr.bf16.mxu0 0
  %1496 = vmatpush1.bf16.msra.mxu0 0
  %1497 = vmatprep.subr.bf16.mxu0 0
  %1498 = vmatpush1.bf16.msra.mxu0 0
  %1499 = vmatprep.subr.bf16.mxu0 0
  %1500 = vmatpush1.bf16.msra.mxu0 0
  %1501 = vmatprep.subr.bf16.mxu0 0
  %1502 = vmatpush1.bf16.msra.mxu0 0
  %1503 = vmatprep.subr.bf16.mxu0 0
  %1504 = vmatpush1.bf16.msra.mxu0 0
  %1505 = vmatprep.subr.bf16.mxu0 0
  %1506 = vmatpush1.bf16.msra.mxu0 0
  %1507 = vmatprep.subr.bf16.mxu0 0
  %1508 = vmatpush1.bf16.msra.mxu0 0
  %1509 = vmatprep.subr.bf16.mxu0 0
  %1510 = vmatpush1.bf16.msra.mxu0 0
  %1511 = vmatprep.mubr.bf16.mxu0 0
  %1512 = vmatmul.mubr.bf16.gmra.mrb[0].mxu0 %v1264
  %v1513 = vpop.f32.mrb[0].mxu0
  %v1514 = vadd.f32 %v209, %v1513
  %v1515 = vpop.f32.mrb[0].mxu0
  %v1516 = vadd.f32 %v213, %v1515
  %v1517 = vpop.f32.mrb[0].mxu0
  %v1518 = vpop.f32.mrb[0].mxu0
  %1519 = vdwg.mxu0
  %1520 = vmatprep.subr.bf16.mxu0 %v987
  %1521 = vmatpush1.bf16.msra.mxu0 %v986
  %1522 = vmatprep.subr.bf16.mxu0 %v1043
  %1523 = vmatpush1.bf16.msra.mxu0 %v1042
  %1524 = vmatprep.subr.bf16.mxu0 %v1286
  %1525 = vmatpush1.bf16.msra.mxu0 %v1283
  %1526 = vmatprep.subr.bf16.mxu0 0
  %1527 = vmatpush1.bf16.msra.mxu0 0
  %1528 = vmatprep.subr.bf16.mxu0 0
  %1529 = vmatpush1.bf16.msra.mxu0 0
  %1530 = vmatprep.subr.bf16.mxu0 0
  %1531 = vmatpush1.bf16.msra.mxu0 0
  %1532 = vmatprep.subr.bf16.mxu0 0
  %1533 = vmatpush1.bf16.msra.mxu0 0
  %1534 = vmatprep.subr.bf16.mxu0 0
  %1535 = vmatpush1.bf16.msra.mxu0 0
  %1536 = vmatprep.subr.bf16.mxu0 0
  %1537 = vmatpush1.bf16.msra.mxu0 0
  %1538 = vmatprep.subr.bf16.mxu0 0
  %1539 = vmatpush1.bf16.msra.mxu0 0
  %1540 = vmatprep.subr.bf16.mxu0 0
  %1541 = vmatpush1.bf16.msra.mxu0 0
  %1542 = vmatprep.subr.bf16.mxu0 0
  %1543 = vmatpush1.bf16.msra.mxu0 0
  %1544 = vmatprep.subr.bf16.mxu0 0
  %1545 = vmatpush1.bf16.msra.mxu0 0
  %1546 = vmatprep.subr.bf16.mxu0 0
  %1547 = vmatpush1.bf16.msra.mxu0 0
  %1548 = vmatprep.subr.bf16.mxu0 0
  %1549 = vmatpush1.bf16.msra.mxu0 0
  %1550 = vmatprep.subr.bf16.mxu0 0
  %1551 = vmatpush1.bf16.msra.mxu0 0
  %1552 = vmatprep.mubr.bf16.mxu0 0
  %1553 = vmatmul.mubr.bf16.gmra.mrb[0].mxu0 %v1264
  %v1554 = vpop.f32.mrb[0].mxu0
  %v1555 = vadd.f32 %v217, %v1554
  %v1556 = vpop.f32.mrb[0].mxu0
  %v1557 = vadd.f32 %v221, %v1556
  %v1558 = vpop.f32.mrb[0].mxu0
  %v1559 = vpop.f32.mrb[0].mxu0
  %1560 = vdwg.mxu0
  %1561 = vmatprep.subr.bf16.mxu0 %v989
  %1562 = vmatpush1.bf16.msra.mxu0 %v988
  %1563 = vmatprep.subr.bf16.mxu0 %v1045
  %1564 = vmatpush1.bf16.msra.mxu0 %v1044
  %1565 = vmatprep.subr.bf16.mxu0 %v1292
  %1566 = vmatpush1.bf16.msra.mxu0 %v1289
  %1567 = vmatprep.subr.bf16.mxu0 0
  %1568 = vmatpush1.bf16.msra.mxu0 0
  %1569 = vmatprep.subr.bf16.mxu0 0
  %1570 = vmatpush1.bf16.msra.mxu0 0
  %1571 = vmatprep.subr.bf16.mxu0 0
  %1572 = vmatpush1.bf16.msra.mxu0 0
  %1573 = vmatprep.subr.bf16.mxu0 0
  %1574 = vmatpush1.bf16.msra.mxu0 0
  %1575 = vmatprep.subr.bf16.mxu0 0
  %1576 = vmatpush1.bf16.msra.mxu0 0
  %1577 = vmatprep.subr.bf16.mxu0 0
  %1578 = vmatpush1.bf16.msra.mxu0 0
  %1579 = vmatprep.subr.bf16.mxu0 0
  %1580 = vmatpush1.bf16.msra.mxu0 0
  %1581 = vmatprep.subr.bf16.mxu0 0
  %1582 = vmatpush1.bf16.msra.mxu0 0
  %1583 = vmatprep.subr.bf16.mxu0 0
  %1584 = vmatpush1.bf16.msra.mxu0 0
  %1585 = vmatprep.subr.bf16.mxu0 0
  %1586 = vmatpush1.bf16.msra.mxu0 0
  %1587 = vmatprep.subr.bf16.mxu0 0
  %1588 = vmatpush1.bf16.msra.mxu0 0
  %1589 = vmatprep.subr.bf16.mxu0 0
  %1590 = vmatpush1.bf16.msra.mxu0 0
  %1591 = vmatprep.subr.bf16.mxu0 0
  %1592 = vmatpush1.bf16.msra.mxu0 0
  %1593 = vmatprep.mubr.bf16.mxu0 0
  %1594 = vmatmul.mubr.bf16.gmra.mrb[0].mxu0 %v1264
  %v1595 = vpop.f32.mrb[0].mxu0
  %v1596 = vadd.f32 %v225, %v1595
  %v1597 = vpop.f32.mrb[0].mxu0
  %v1598 = vadd.f32 %v229, %v1597
  %v1599 = vpop.f32.mrb[0].mxu0
  %v1600 = vpop.f32.mrb[0].mxu0
  %1601 = vdwg.mxu0
  %1602 = vmatprep.subr.bf16.mxu0 %v991
  %1603 = vmatpush1.bf16.msra.mxu0 %v990
  %1604 = vmatprep.subr.bf16.mxu0 %v1047
  %1605 = vmatpush1.bf16.msra.mxu0 %v1046
  %1606 = vmatprep.subr.bf16.mxu0 %v1298
  %1607 = vmatpush1.bf16.msra.mxu0 %v1295
  %1608 = vmatprep.subr.bf16.mxu0 0
  %1609 = vmatpush1.bf16.msra.mxu0 0
  %1610 = vmatprep.subr.bf16.mxu0 0
  %1611 = vmatpush1.bf16.msra.mxu0 0
  %1612 = vmatprep.subr.bf16.mxu0 0
  %1613 = vmatpush1.bf16.msra.mxu0 0
  %1614 = vmatprep.subr.bf16.mxu0 0
  %1615 = vmatpush1.bf16.msra.mxu0 0
  %1616 = vmatprep.subr.bf16.mxu0 0
  %1617 = vmatpush1.bf16.msra.mxu0 0
  %1618 = vmatprep.subr.bf16.mxu0 0
  %1619 = vmatpush1.bf16.msra.mxu0 0
  %1620 = vmatprep.subr.bf16.mxu0 0
  %1621 = vmatpush1.bf16.msra.mxu0 0
  %1622 = vmatprep.subr.bf16.mxu0 0
  %1623 = vmatpush1.bf16.msra.mxu0 0
  %1624 = vmatprep.subr.bf16.mxu0 0
  %1625 = vmatpush1.bf16.msra.mxu0 0
  %1626 = vmatprep.subr.bf16.mxu0 0
  %1627 = vmatpush1.bf16.msra.mxu0 0
  %1628 = vmatprep.subr.bf16.mxu0 0
  %1629 = vmatpush1.bf16.msra.mxu0 0
  %1630 = vmatprep.subr.bf16.mxu0 0
  %1631 = vmatpush1.bf16.msra.mxu0 0
  %1632 = vmatprep.subr.bf16.mxu0 0
  %1633 = vmatpush1.bf16.msra.mxu0 0
  %1634 = vmatprep.mubr.bf16.mxu0 0
  %1635 = vmatmul.mubr.bf16.gmra.mrb[0].mxu0 %v1264
  %v1636 = vpop.f32.mrb[0].mxu0
  %v1637 = vadd.f32 %v233, %v1636
  %v1638 = vpop.f32.mrb[0].mxu0
  %v1639 = vadd.f32 %v237, %v1638
  %v1640 = vpop.f32.mrb[0].mxu0
  %v1641 = vpop.f32.mrb[0].mxu0
  %1642 = vdwg.mxu0
  %1643 = vmatprep.subr.bf16.mxu0 %v993
  %1644 = vmatpush1.bf16.msra.mxu0 %v992
  %1645 = vmatprep.subr.bf16.mxu0 %v1049
  %1646 = vmatpush1.bf16.msra.mxu0 %v1048
  %1647 = vmatprep.subr.bf16.mxu0 %v1304
  %1648 = vmatpush1.bf16.msra.mxu0 %v1301
  %1649 = vmatprep.subr.bf16.mxu0 0
  %1650 = vmatpush1.bf16.msra.mxu0 0
  %1651 = vmatprep.subr.bf16.mxu0 0
  %1652 = vmatpush1.bf16.msra.mxu0 0
  %1653 = vmatprep.subr.bf16.mxu0 0
  %1654 = vmatpush1.bf16.msra.mxu0 0
  %1655 = vmatprep.subr.bf16.mxu0 0
  %1656 = vmatpush1.bf16.msra.mxu0 0
  %1657 = vmatprep.subr.bf16.mxu0 0
  %1658 = vmatpush1.bf16.msra.mxu0 0
  %1659 = vmatprep.subr.bf16.mxu0 0
  %1660 = vmatpush1.bf16.msra.mxu0 0
  %1661 = vmatprep.subr.bf16.mxu0 0
  %1662 = vmatpush1.bf16.msra.mxu0 0
  %1663 = vmatprep.subr.bf16.mxu0 0
  %1664 = vmatpush1.bf16.msra.mxu0 0
  %1665 = vmatprep.subr.bf16.mxu0 0
  %1666 = vmatpush1.bf16.msra.mxu0 0
  %1667 = vmatprep.subr.bf16.mxu0 0
  %1668 = vmatpush1.bf16.msra.mxu0 0
  %1669 = vmatprep.subr.bf16.mxu0 0
  %1670 = vmatpush1.bf16.msra.mxu0 0
  %1671 = vmatprep.subr.bf16.mxu0 0
  %1672 = vmatpush1.bf16.msra.mxu0 0
  %1673 = vmatprep.subr.bf16.mxu0 0
  %1674 = vmatpush1.bf16.msra.mxu0 0
  %1675 = vmatprep.mubr.bf16.mxu0 0
  %1676 = vmatmul.mubr.bf16.gmra.mrb[0].mxu0 %v1264
  %v1677 = vpop.f32.mrb[0].mxu0
  %v1678 = vadd.f32 %v241, %v1677
  %v1679 = vpop.f32.mrb[0].mxu0
  %v1680 = vadd.f32 %v245, %v1679
  %v1681 = vpop.f32.mrb[0].mxu0
  %v1682 = vpop.f32.mrb[0].mxu0
  %1683 = vdwg.mxu0
  %1684 = vmatprep.subr.bf16.mxu0 %v995
  %1685 = vmatpush1.bf16.msra.mxu0 %v994
  %1686 = vmatprep.subr.bf16.mxu0 %v1051
  %1687 = vmatpush1.bf16.msra.mxu0 %v1050
  %1688 = vmatprep.subr.bf16.mxu0 %v1310
  %1689 = vmatpush1.bf16.msra.mxu0 %v1307
  %1690 = vmatprep.subr.bf16.mxu0 0
  %1691 = vmatpush1.bf16.msra.mxu0 0
  %1692 = vmatprep.subr.bf16.mxu0 0
  %1693 = vmatpush1.bf16.msra.mxu0 0
  %1694 = vmatprep.subr.bf16.mxu0 0
  %1695 = vmatpush1.bf16.msra.mxu0 0
  %1696 = vmatprep.subr.bf16.mxu0 0
  %1697 = vmatpush1.bf16.msra.mxu0 0
  %1698 = vmatprep.subr.bf16.mxu0 0
  %1699 = vmatpush1.bf16.msra.mxu0 0
  %1700 = vmatprep.subr.bf16.mxu0 0
  %1701 = vmatpush1.bf16.msra.mxu0 0
  %1702 = vmatprep.subr.bf16.mxu0 0
  %1703 = vmatpush1.bf16.msra.mxu0 0
  %1704 = vmatprep.subr.bf16.mxu0 0
  %1705 = vmatpush1.bf16.msra.mxu0 0
  %1706 = vmatprep.subr.bf16.mxu0 0
  %1707 = vmatpush1.bf16.msra.mxu0 0
  %1708 = vmatprep.subr.bf16.mxu0 0
  %1709 = vmatpush1.bf16.msra.mxu0 0
  %1710 = vmatprep.subr.bf16.mxu0 0
  %1711 = vmatpush1.bf16.msra.mxu0 0
  %1712 = vmatprep.subr.bf16.mxu0 0
  %1713 = vmatpush1.bf16.msra.mxu0 0
  %1714 = vmatprep.subr.bf16.mxu0 0
  %1715 = vmatpush1.bf16.msra.mxu0 0
  %1716 = vmatprep.mubr.bf16.mxu0 0
  %1717 = vmatmul.mubr.bf16.gmra.mrb[0].mxu0 %v1264
  %v1718 = vpop.f32.mrb[0].mxu0
  %v1719 = vadd.f32 %v249, %v1718
  %v1720 = vpop.f32.mrb[0].mxu0
  %v1721 = vadd.f32 %v253, %v1720
  %v1722 = vpop.f32.mrb[0].mxu0
  %v1723 = vpop.f32.mrb[0].mxu0
  %1724 = vdwg.mxu0
  %1725 = vmatprep.subr.bf16.mxu0 %v997
  %1726 = vmatpush1.bf16.msra.mxu0 %v996
  %1727 = vmatprep.subr.bf16.mxu0 %v1053
  %1728 = vmatpush1.bf16.msra.mxu0 %v1052
  %1729 = vmatprep.subr.bf16.mxu0 %v1316
  %1730 = vmatpush1.bf16.msra.mxu0 %v1313
  %1731 = vmatprep.subr.bf16.mxu0 0
  %1732 = vmatpush1.bf16.msra.mxu0 0
  %1733 = vmatprep.subr.bf16.mxu0 0
  %1734 = vmatpush1.bf16.msra.mxu0 0
  %1735 = vmatprep.subr.bf16.mxu0 0
  %1736 = vmatpush1.bf16.msra.mxu0 0
  %1737 = vmatprep.subr.bf16.mxu0 0
  %1738 = vmatpush1.bf16.msra.mxu0 0
  %1739 = vmatprep.subr.bf16.mxu0 0
  %1740 = vmatpush1.bf16.msra.mxu0 0
  %1741 = vmatprep.subr.bf16.mxu0 0
  %1742 = vmatpush1.bf16.msra.mxu0 0
  %1743 = vmatprep.subr.bf16.mxu0 0
  %1744 = vmatpush1.bf16.msra.mxu0 0
  %1745 = vmatprep.subr.bf16.mxu0 0
  %1746 = vmatpush1.bf16.msra.mxu0 0
  %1747 = vmatprep.subr.bf16.mxu0 0
  %1748 = vmatpush1.bf16.msra.mxu0 0
  %1749 = vmatprep.subr.bf16.mxu0 0
  %1750 = vmatpush1.bf16.msra.mxu0 0
  %1751 = vmatprep.subr.bf16.mxu0 0
  %1752 = vmatpush1.bf16.msra.mxu0 0
  %1753 = vmatprep.subr.bf16.mxu0 0
  %1754 = vmatpush1.bf16.msra.mxu0 0
  %1755 = vmatprep.subr.bf16.mxu0 0
  %1756 = vmatpush1.bf16.msra.mxu0 0
  %1757 = vmatprep.mubr.bf16.mxu0 0
  %1758 = vmatmul.mubr.bf16.gmra.mrb[0].mxu0 %v1264
  %v1759 = vpop.f32.mrb[0].mxu0
  %v1760 = vadd.f32 %v257, %v1759
  %v1761 = vpop.f32.mrb[0].mxu0
  %v1762 = vadd.f32 %v261, %v1761
  %v1763 = vpop.f32.mrb[0].mxu0
  %v1764 = vpop.f32.mrb[0].mxu0
  %1765 = vdwg.mxu0
  %1766 = vmatprep.subr.bf16.mxu0 %v999
  %1767 = vmatpush1.bf16.msra.mxu0 %v998
  %1768 = vmatprep.subr.bf16.mxu0 %v1055
  %1769 = vmatpush1.bf16.msra.mxu0 %v1054
  %1770 = vmatprep.subr.bf16.mxu0 %v1322
  %1771 = vmatpush1.bf16.msra.mxu0 %v1319
  %1772 = vmatprep.subr.bf16.mxu0 0
  %1773 = vmatpush1.bf16.msra.mxu0 0
  %1774 = vmatprep.subr.bf16.mxu0 0
  %1775 = vmatpush1.bf16.msra.mxu0 0
  %1776 = vmatprep.subr.bf16.mxu0 0
  %1777 = vmatpush1.bf16.msra.mxu0 0
  %1778 = vmatprep.subr.bf16.mxu0 0
  %1779 = vmatpush1.bf16.msra.mxu0 0
  %1780 = vmatprep.subr.bf16.mxu0 0
  %1781 = vmatpush1.bf16.msra.mxu0 0
  %1782 = vmatprep.subr.bf16.mxu0 0
  %1783 = vmatpush1.bf16.msra.mxu0 0
  %1784 = vmatprep.subr.bf16.mxu0 0
  %1785 = vmatpush1.bf16.msra.mxu0 0
  %1786 = vmatprep.subr.bf16.mxu0 0
  %1787 = vmatpush1.bf16.msra.mxu0 0
  %1788 = vmatprep.subr.bf16.mxu0 0
  %1789 = vmatpush1.bf16.msra.mxu0 0
  %1790 = vmatprep.subr.bf16.mxu0 0
  %1791 = vmatpush1.bf16.msra.mxu0 0
  %1792 = vmatprep.subr.bf16.mxu0 0
  %1793 = vmatpush1.bf16.msra.mxu0 0
  %1794 = vmatprep.subr.bf16.mxu0 0
  %1795 = vmatpush1.bf16.msra.mxu0 0
  %1796 = vmatprep.subr.bf16.mxu0 0
  %1797 = vmatpush1.bf16.msra.mxu0 0
  %1798 = vmatprep.mubr.bf16.mxu0 0
  %1799 = vmatmul.mubr.bf16.gmra.mrb[0].mxu0 %v1264
  %v1800 = vpop.f32.mrb[0].mxu0
  %v1801 = vadd.f32 %v265, %v1800
  %v1802 = vpop.f32.mrb[0].mxu0
  %v1803 = vadd.f32 %v269, %v1802
  %v1804 = vpop.f32.mrb[0].mxu0
  %v1805 = vpop.f32.mrb[0].mxu0
  %1806 = vdwg.mxu0
  %1807 = vmatprep.subr.bf16.mxu0 %v1001
  %1808 = vmatpush1.bf16.msra.mxu0 %v1000
  %1809 = vmatprep.subr.bf16.mxu0 %v1057
  %1810 = vmatpush1.bf16.msra.mxu0 %v1056
  %1811 = vmatprep.subr.bf16.mxu0 %v1328
  %1812 = vmatpush1.bf16.msra.mxu0 %v1325
  %1813 = vmatprep.subr.bf16.mxu0 0
  %1814 = vmatpush1.bf16.msra.mxu0 0
  %1815 = vmatprep.subr.bf16.mxu0 0
  %1816 = vmatpush1.bf16.msra.mxu0 0
  %1817 = vmatprep.subr.bf16.mxu0 0
  %1818 = vmatpush1.bf16.msra.mxu0 0
  %1819 = vmatprep.subr.bf16.mxu0 0
  %1820 = vmatpush1.bf16.msra.mxu0 0
  %1821 = vmatprep.subr.bf16.mxu0 0
  %1822 = vmatpush1.bf16.msra.mxu0 0
  %1823 = vmatprep.subr.bf16.mxu0 0
  %1824 = vmatpush1.bf16.msra.mxu0 0
  %1825 = vmatprep.subr.bf16.mxu0 0
  %1826 = vmatpush1.bf16.msra.mxu0 0
  %1827 = vmatprep.subr.bf16.mxu0 0
  %1828 = vmatpush1.bf16.msra.mxu0 0
  %1829 = vmatprep.subr.bf16.mxu0 0
  %1830 = vmatpush1.bf16.msra.mxu0 0
  %1831 = vmatprep.subr.bf16.mxu0 0
  %1832 = vmatpush1.bf16.msra.mxu0 0
  %1833 = vmatprep.subr.bf16.mxu0 0
  %1834 = vmatpush1.bf16.msra.mxu0 0
  %1835 = vmatprep.subr.bf16.mxu0 0
  %1836 = vmatpush1.bf16.msra.mxu0 0
  %1837 = vmatprep.subr.bf16.mxu0 0
  %1838 = vmatpush1.bf16.msra.mxu0 0
  %1839 = vmatprep.mubr.bf16.mxu0 0
  %1840 = vmatmul.mubr.bf16.gmra.mrb[0].mxu0 %v1264
  %v1841 = vpop.f32.mrb[0].mxu0
  %v1842 = vadd.f32 %v273, %v1841
  %v1843 = vpop.f32.mrb[0].mxu0
  %v1844 = vadd.f32 %v277, %v1843
  %v1845 = vpop.f32.mrb[0].mxu0
  %v1846 = vpop.f32.mrb[0].mxu0
  %1847 = vdwg.mxu0
  %1848 = vmatprep.subr.bf16.mxu0 %v1003
  %1849 = vmatpush1.bf16.msra.mxu0 %v1002
  %1850 = vmatprep.subr.bf16.mxu0 %v1059
  %1851 = vmatpush1.bf16.msra.mxu0 %v1058
  %1852 = vmatprep.subr.bf16.mxu0 %v1334
  %1853 = vmatpush1.bf16.msra.mxu0 %v1331
  %1854 = vmatprep.subr.bf16.mxu0 0
  %1855 = vmatpush1.bf16.msra.mxu0 0
  %1856 = vmatprep.subr.bf16.mxu0 0
  %1857 = vmatpush1.bf16.msra.mxu0 0
  %1858 = vmatprep.subr.bf16.mxu0 0
  %1859 = vmatpush1.bf16.msra.mxu0 0
  %1860 = vmatprep.subr.bf16.mxu0 0
  %1861 = vmatpush1.bf16.msra.mxu0 0
  %1862 = vmatprep.subr.bf16.mxu0 0
  %1863 = vmatpush1.bf16.msra.mxu0 0
  %1864 = vmatprep.subr.bf16.mxu0 0
  %1865 = vmatpush1.bf16.msra.mxu0 0
  %1866 = vmatprep.subr.bf16.mxu0 0
  %1867 = vmatpush1.bf16.msra.mxu0 0
  %1868 = vmatprep.subr.bf16.mxu0 0
  %1869 = vmatpush1.bf16.msra.mxu0 0
  %1870 = vmatprep.subr.bf16.mxu0 0
  %1871 = vmatpush1.bf16.msra.mxu0 0
  %1872 = vmatprep.subr.bf16.mxu0 0
  %1873 = vmatpush1.bf16.msra.mxu0 0
  %1874 = vmatprep.subr.bf16.mxu0 0
  %1875 = vmatpush1.bf16.msra.mxu0 0
  %1876 = vmatprep.subr.bf16.mxu0 0
  %1877 = vmatpush1.bf16.msra.mxu0 0
  %1878 = vmatprep.subr.bf16.mxu0 0
  %1879 = vmatpush1.bf16.msra.mxu0 0
  %1880 = vmatprep.mubr.bf16.mxu0 0
  %1881 = vmatmul.mubr.bf16.gmra.mrb[0].mxu0 %v1264
  %v1882 = vpop.f32.mrb[0].mxu0
  %v1883 = vadd.f32 %v281, %v1882
  %v1884 = vpop.f32.mrb[0].mxu0
  %v1885 = vadd.f32 %v285, %v1884
  %v1886 = vpop.f32.mrb[0].mxu0
  %v1887 = vpop.f32.mrb[0].mxu0
  %1888 = vdwg.mxu0
  %1889 = vmatprep.subr.bf16.mxu0 %v1005
  %1890 = vmatpush1.bf16.msra.mxu0 %v1004
  %1891 = vmatprep.subr.bf16.mxu0 %v1061
  %1892 = vmatpush1.bf16.msra.mxu0 %v1060
  %1893 = vmatprep.subr.bf16.mxu0 %v1340
  %1894 = vmatpush1.bf16.msra.mxu0 %v1337
  %1895 = vmatprep.subr.bf16.mxu0 0
  %1896 = vmatpush1.bf16.msra.mxu0 0
  %1897 = vmatprep.subr.bf16.mxu0 0
  %1898 = vmatpush1.bf16.msra.mxu0 0
  %1899 = vmatprep.subr.bf16.mxu0 0
  %1900 = vmatpush1.bf16.msra.mxu0 0
  %1901 = vmatprep.subr.bf16.mxu0 0
  %1902 = vmatpush1.bf16.msra.mxu0 0
  %1903 = vmatprep.subr.bf16.mxu0 0
  %1904 = vmatpush1.bf16.msra.mxu0 0
  %1905 = vmatprep.subr.bf16.mxu0 0
  %1906 = vmatpush1.bf16.msra.mxu0 0
  %1907 = vmatprep.subr.bf16.mxu0 0
  %1908 = vmatpush1.bf16.msra.mxu0 0
  %1909 = vmatprep.subr.bf16.mxu0 0
  %1910 = vmatpush1.bf16.msra.mxu0 0
  %1911 = vmatprep.subr.bf16.mxu0 0
  %1912 = vmatpush1.bf16.msra.mxu0 0
  %1913 = vmatprep.subr.bf16.mxu0 0
  %1914 = vmatpush1.bf16.msra.mxu0 0
  %1915 = vmatprep.subr.bf16.mxu0 0
  %1916 = vmatpush1.bf16.msra.mxu0 0
  %1917 = vmatprep.subr.bf16.mxu0 0
  %1918 = vmatpush1.bf16.msra.mxu0 0
  %1919 = vmatprep.subr.bf16.mxu0 0
  %1920 = vmatpush1.bf16.msra.mxu0 0
  %1921 = vmatprep.mubr.bf16.mxu0 0
  %1922 = vmatmul.mubr.bf16.gmra.mrb[0].mxu0 %v1264
  %v1923 = vpop.f32.mrb[0].mxu0
  %v1924 = vadd.f32 %v289, %v1923
  %v1925 = vpop.f32.mrb[0].mxu0
  %v1926 = vadd.f32 %v293, %v1925
  %v1927 = vpop.f32.mrb[0].mxu0
  %v1928 = vpop.f32.mrb[0].mxu0
  %1929 = vdwg.mxu0
  %1930 = vmatprep.subr.bf16.mxu0 %v1007
  %1931 = vmatpush1.bf16.msra.mxu0 %v1006
  %1932 = vmatprep.subr.bf16.mxu0 %v1063
  %1933 = vmatpush1.bf16.msra.mxu0 %v1062
  %1934 = vmatprep.subr.bf16.mxu0 %v1346
  %1935 = vmatpush1.bf16.msra.mxu0 %v1343
  %1936 = vmatprep.subr.bf16.mxu0 0
  %1937 = vmatpush1.bf16.msra.mxu0 0
  %1938 = vmatprep.subr.bf16.mxu0 0
  %1939 = vmatpush1.bf16.msra.mxu0 0
  %1940 = vmatprep.subr.bf16.mxu0 0
  %1941 = vmatpush1.bf16.msra.mxu0 0
  %1942 = vmatprep.subr.bf16.mxu0 0
  %1943 = vmatpush1.bf16.msra.mxu0 0
  %1944 = vmatprep.subr.bf16.mxu0 0
  %1945 = vmatpush1.bf16.msra.mxu0 0
  %1946 = vmatprep.subr.bf16.mxu0 0
  %1947 = vmatpush1.bf16.msra.mxu0 0
  %1948 = vmatprep.subr.bf16.mxu0 0
  %1949 = vmatpush1.bf16.msra.mxu0 0
  %1950 = vmatprep.subr.bf16.mxu0 0
  %1951 = vmatpush1.bf16.msra.mxu0 0
  %1952 = vmatprep.subr.bf16.mxu0 0
  %1953 = vmatpush1.bf16.msra.mxu0 0
  %1954 = vmatprep.subr.bf16.mxu0 0
  %1955 = vmatpush1.bf16.msra.mxu0 0
  %1956 = vmatprep.subr.bf16.mxu0 0
  %1957 = vmatpush1.bf16.msra.mxu0 0
  %1958 = vmatprep.subr.bf16.mxu0 0
  %1959 = vmatpush1.bf16.msra.mxu0 0
  %1960 = vmatprep.subr.bf16.mxu0 0
  %1961 = vmatpush1.bf16.msra.mxu0 0
  %1962 = vmatprep.mubr.bf16.mxu0 0
  %1963 = vmatmul.mubr.bf16.gmra.mrb[0].mxu0 %v1264
  %v1964 = vpop.f32.mrb[0].mxu0
  %v1965 = vadd.f32 %v297, %v1964
  %v1966 = vpop.f32.mrb[0].mxu0
  %v1967 = vadd.f32 %v301, %v1966
  %v1968 = vpop.f32.mrb[0].mxu0
  %v1969 = vpop.f32.mrb[0].mxu0
  %1970 = vdwg.mxu0
  %1971 = vmatprep.subr.bf16.mxu0 %v1009
  %1972 = vmatpush1.bf16.msra.mxu0 %v1008
  %1973 = vmatprep.subr.bf16.mxu0 %v1065
  %1974 = vmatpush1.bf16.msra.mxu0 %v1064
  %1975 = vmatprep.subr.bf16.mxu0 %v1352
  %1976 = vmatpush1.bf16.msra.mxu0 %v1349
  %1977 = vmatprep.subr.bf16.mxu0 0
  %1978 = vmatpush1.bf16.msra.mxu0 0
  %1979 = vmatprep.subr.bf16.mxu0 0
  %1980 = vmatpush1.bf16.msra.mxu0 0
  %1981 = vmatprep.subr.bf16.mxu0 0
  %1982 = vmatpush1.bf16.msra.mxu0 0
  %1983 = vmatprep.subr.bf16.mxu0 0
  %1984 = vmatpush1.bf16.msra.mxu0 0
  %1985 = vmatprep.subr.bf16.mxu0 0
  %1986 = vmatpush1.bf16.msra.mxu0 0
  %1987 = vmatprep.subr.bf16.mxu0 0
  %1988 = vmatpush1.bf16.msra.mxu0 0
  %1989 = vmatprep.subr.bf16.mxu0 0
  %1990 = vmatpush1.bf16.msra.mxu0 0
  %1991 = vmatprep.subr.bf16.mxu0 0
  %1992 = vmatpush1.bf16.msra.mxu0 0
  %1993 = vmatprep.subr.bf16.mxu0 0
  %1994 = vmatpush1.bf16.msra.mxu0 0
  %1995 = vmatprep.subr.bf16.mxu0 0
  %1996 = vmatpush1.bf16.msra.mxu0 0
  %1997 = vmatprep.subr.bf16.mxu0 0
  %1998 = vmatpush1.bf16.msra.mxu0 0
  %1999 = vmatprep.subr.bf16.mxu0 0
  %2000 = vmatpush1.bf16.msra.mxu0 0
  %2001 = vmatprep.subr.bf16.mxu0 0
  %2002 = vmatpush1.bf16.msra.mxu0 0
  %2003 = vmatprep.mubr.bf16.mxu0 0
  %2004 = vmatmul.mubr.bf16.gmra.mrb[0].mxu0 %v1264
  %v2005 = vpop.f32.mrb[0].mxu0
  %v2006 = vadd.f32 %v305, %v2005
  %v2007 = vpop.f32.mrb[0].mxu0
  %v2008 = vadd.f32 %v309, %v2007
  %v2009 = vpop.f32.mrb[0].mxu0
  %v2010 = vpop.f32.mrb[0].mxu0
  %2011 = vdwg.mxu0
  %2012 = vmatprep.subr.bf16.mxu0 %v1011
  %2013 = vmatpush1.bf16.msra.mxu0 %v1010
  %2014 = vmatprep.subr.bf16.mxu0 %v1067
  %2015 = vmatpush1.bf16.msra.mxu0 %v1066
  %2016 = vmatprep.subr.bf16.mxu0 %v1358
  %2017 = vmatpush1.bf16.msra.mxu0 %v1355
  %2018 = vmatprep.subr.bf16.mxu0 0
  %2019 = vmatpush1.bf16.msra.mxu0 0
  %2020 = vmatprep.subr.bf16.mxu0 0
  %2021 = vmatpush1.bf16.msra.mxu0 0
  %2022 = vmatprep.subr.bf16.mxu0 0
  %2023 = vmatpush1.bf16.msra.mxu0 0
  %2024 = vmatprep.subr.bf16.mxu0 0
  %2025 = vmatpush1.bf16.msra.mxu0 0
  %2026 = vmatprep.subr.bf16.mxu0 0
  %2027 = vmatpush1.bf16.msra.mxu0 0
  %2028 = vmatprep.subr.bf16.mxu0 0
  %2029 = vmatpush1.bf16.msra.mxu0 0
  %2030 = vmatprep.subr.bf16.mxu0 0
  %2031 = vmatpush1.bf16.msra.mxu0 0
  %2032 = vmatprep.subr.bf16.mxu0 0
  %2033 = vmatpush1.bf16.msra.mxu0 0
  %2034 = vmatprep.subr.bf16.mxu0 0
  %2035 = vmatpush1.bf16.msra.mxu0 0
  %2036 = vmatprep.subr.bf16.mxu0 0
  %2037 = vmatpush1.bf16.msra.mxu0 0
  %2038 = vmatprep.subr.bf16.mxu0 0
  %2039 = vmatpush1.bf16.msra.mxu0 0
  %2040 = vmatprep.subr.bf16.mxu0 0
  %2041 = vmatpush1.bf16.msra.mxu0 0
  %2042 = vmatprep.subr.bf16.mxu0 0
  %2043 = vmatpush1.bf16.msra.mxu0 0
  %2044 = vmatprep.mubr.bf16.mxu0 0
  %2045 = vmatmul.mubr.bf16.gmra.mrb[0].mxu0 %v1264
  %v2046 = vpop.f32.mrb[0].mxu0
  %v2047 = vadd.f32 %v313, %v2046
  %v2048 = vpop.f32.mrb[0].mxu0
  %v2049 = vadd.f32 %v317, %v2048
  %v2050 = vpop.f32.mrb[0].mxu0
  %v2051 = vpop.f32.mrb[0].mxu0
  %2052 = vdwg.mxu0
  %2053 = vmatprep.subr.bf16.mxu0 %v1013
  %2054 = vmatpush1.bf16.msra.mxu0 %v1012
  %2055 = vmatprep.subr.bf16.mxu0 %v1069
  %2056 = vmatpush1.bf16.msra.mxu0 %v1068
  %2057 = vmatprep.subr.bf16.mxu0 %v1364
  %2058 = vmatpush1.bf16.msra.mxu0 %v1361
  %2059 = vmatprep.subr.bf16.mxu0 0
  %2060 = vmatpush1.bf16.msra.mxu0 0
  %2061 = vmatprep.subr.bf16.mxu0 0
  %2062 = vmatpush1.bf16.msra.mxu0 0
  %2063 = vmatprep.subr.bf16.mxu0 0
  %2064 = vmatpush1.bf16.msra.mxu0 0
  %2065 = vmatprep.subr.bf16.mxu0 0
  %2066 = vmatpush1.bf16.msra.mxu0 0
  %2067 = vmatprep.subr.bf16.mxu0 0
  %2068 = vmatpush1.bf16.msra.mxu0 0
  %2069 = vmatprep.subr.bf16.mxu0 0
  %2070 = vmatpush1.bf16.msra.mxu0 0
  %2071 = vmatprep.subr.bf16.mxu0 0
  %2072 = vmatpush1.bf16.msra.mxu0 0
  %2073 = vmatprep.subr.bf16.mxu0 0
  %2074 = vmatpush1.bf16.msra.mxu0 0
  %2075 = vmatprep.subr.bf16.mxu0 0
  %2076 = vmatpush1.bf16.msra.mxu0 0
  %2077 = vmatprep.subr.bf16.mxu0 0
  %2078 = vmatpush1.bf16.msra.mxu0 0
  %2079 = vmatprep.subr.bf16.mxu0 0
  %2080 = vmatpush1.bf16.msra.mxu0 0
  %2081 = vmatprep.subr.bf16.mxu0 0
  %2082 = vmatpush1.bf16.msra.mxu0 0
  %2083 = vmatprep.subr.bf16.mxu0 0
  %2084 = vmatpush1.bf16.msra.mxu0 0
  %2085 = vmatprep.mubr.bf16.mxu0 0
  %2086 = vmatmul.mubr.bf16.gmra.mrb[0].mxu0 %v1264
  %v2087 = vpop.f32.mrb[0].mxu0
  %v2088 = vadd.f32 %v321, %v2087
  %v2089 = vpop.f32.mrb[0].mxu0
  %v2090 = vadd.f32 %v325, %v2089
  %v2091 = vpop.f32.mrb[0].mxu0
  %v2092 = vpop.f32.mrb[0].mxu0
  %2093 = vdwg.mxu0
  %2094 = vmatprep.subr.bf16.mxu0 %v1015
  %2095 = vmatpush1.bf16.msra.mxu0 %v1014
  %2096 = vmatprep.subr.bf16.mxu0 %v1071
  %2097 = vmatpush1.bf16.msra.mxu0 %v1070
  %2098 = vmatprep.subr.bf16.mxu0 %v1370
  %2099 = vmatpush1.bf16.msra.mxu0 %v1367
  %2100 = vmatprep.subr.bf16.mxu0 0
  %2101 = vmatpush1.bf16.msra.mxu0 0
  %2102 = vmatprep.subr.bf16.mxu0 0
  %2103 = vmatpush1.bf16.msra.mxu0 0
  %2104 = vmatprep.subr.bf16.mxu0 0
  %2105 = vmatpush1.bf16.msra.mxu0 0
  %2106 = vmatprep.subr.bf16.mxu0 0
  %2107 = vmatpush1.bf16.msra.mxu0 0
  %2108 = vmatprep.subr.bf16.mxu0 0
  %2109 = vmatpush1.bf16.msra.mxu0 0
  %2110 = vmatprep.subr.bf16.mxu0 0
  %2111 = vmatpush1.bf16.msra.mxu0 0
  %2112 = vmatprep.subr.bf16.mxu0 0
  %2113 = vmatpush1.bf16.msra.mxu0 0
  %2114 = vmatprep.subr.bf16.mxu0 0
  %2115 = vmatpush1.bf16.msra.mxu0 0
  %2116 = vmatprep.subr.bf16.mxu0 0
  %2117 = vmatpush1.bf16.msra.mxu0 0
  %2118 = vmatprep.subr.bf16.mxu0 0
  %2119 = vmatpush1.bf16.msra.mxu0 0
  %2120 = vmatprep.subr.bf16.mxu0 0
  %2121 = vmatpush1.bf16.msra.mxu0 0
  %2122 = vmatprep.subr.bf16.mxu0 0
  %2123 = vmatpush1.bf16.msra.mxu0 0
  %2124 = vmatprep.subr.bf16.mxu0 0
  %2125 = vmatpush1.bf16.msra.mxu0 0
  %2126 = vmatprep.mubr.bf16.mxu0 0
  %2127 = vmatmul.mubr.bf16.gmra.mrb[0].mxu0 %v1264
  %v2128 = vpop.f32.mrb[0].mxu0
  %v2129 = vadd.f32 %v329, %v2128
  %v2130 = vpop.f32.mrb[0].mxu0
  %v2131 = vadd.f32 %v333, %v2130
  %v2132 = vpop.f32.mrb[0].mxu0
  %v2133 = vpop.f32.mrb[0].mxu0
  %2134 = vdwg.mxu0
  %2135 = vmatprep.subr.bf16.mxu0 %v1017
  %2136 = vmatpush1.bf16.msra.mxu0 %v1016
  %2137 = vmatprep.subr.bf16.mxu0 %v1073
  %2138 = vmatpush1.bf16.msra.mxu0 %v1072
  %2139 = vmatprep.subr.bf16.mxu0 %v1376
  %2140 = vmatpush1.bf16.msra.mxu0 %v1373
  %2141 = vmatprep.subr.bf16.mxu0 0
  %2142 = vmatpush1.bf16.msra.mxu0 0
  %2143 = vmatprep.subr.bf16.mxu0 0
  %2144 = vmatpush1.bf16.msra.mxu0 0
  %2145 = vmatprep.subr.bf16.mxu0 0
  %2146 = vmatpush1.bf16.msra.mxu0 0
  %2147 = vmatprep.subr.bf16.mxu0 0
  %2148 = vmatpush1.bf16.msra.mxu0 0
  %2149 = vmatprep.subr.bf16.mxu0 0
  %2150 = vmatpush1.bf16.msra.mxu0 0
  %2151 = vmatprep.subr.bf16.mxu0 0
  %2152 = vmatpush1.bf16.msra.mxu0 0
  %2153 = vmatprep.subr.bf16.mxu0 0
  %2154 = vmatpush1.bf16.msra.mxu0 0
  %2155 = vmatprep.subr.bf16.mxu0 0
  %2156 = vmatpush1.bf16.msra.mxu0 0
  %2157 = vmatprep.subr.bf16.mxu0 0
  %2158 = vmatpush1.bf16.msra.mxu0 0
  %2159 = vmatprep.subr.bf16.mxu0 0
  %2160 = vmatpush1.bf16.msra.mxu0 0
  %2161 = vmatprep.subr.bf16.mxu0 0
  %2162 = vmatpush1.bf16.msra.mxu0 0
  %2163 = vmatprep.subr.bf16.mxu0 0
  %2164 = vmatpush1.bf16.msra.mxu0 0
  %2165 = vmatprep.subr.bf16.mxu0 0
  %2166 = vmatpush1.bf16.msra.mxu0 0
  %2167 = vmatprep.mubr.bf16.mxu0 0
  %2168 = vmatmul.mubr.bf16.gmra.mrb[0].mxu0 %v1264
  %v2169 = vpop.f32.mrb[0].mxu0
  %v2170 = vadd.f32 %v337, %v2169
  %v2171 = vpop.f32.mrb[0].mxu0
  %v2172 = vadd.f32 %v341, %v2171
  %v2173 = vpop.f32.mrb[0].mxu0
  %v2174 = vpop.f32.mrb[0].mxu0
  %2175 = vdwg.mxu0
  %2176 = vmatprep.subr.bf16.mxu0 %v1019
  %2177 = vmatpush1.bf16.msra.mxu0 %v1018
  %2178 = vmatprep.subr.bf16.mxu0 %v1075
  %2179 = vmatpush1.bf16.msra.mxu0 %v1074
  %2180 = vmatprep.subr.bf16.mxu0 %v1382
  %2181 = vmatpush1.bf16.msra.mxu0 %v1379
  %2182 = vmatprep.subr.bf16.mxu0 0
  %2183 = vmatpush1.bf16.msra.mxu0 0
  %2184 = vmatprep.subr.bf16.mxu0 0
  %2185 = vmatpush1.bf16.msra.mxu0 0
  %2186 = vmatprep.subr.bf16.mxu0 0
  %2187 = vmatpush1.bf16.msra.mxu0 0
  %2188 = vmatprep.subr.bf16.mxu0 0
  %2189 = vmatpush1.bf16.msra.mxu0 0
  %2190 = vmatprep.subr.bf16.mxu0 0
  %2191 = vmatpush1.bf16.msra.mxu0 0
  %2192 = vmatprep.subr.bf16.mxu0 0
  %2193 = vmatpush1.bf16.msra.mxu0 0
  %2194 = vmatprep.subr.bf16.mxu0 0
  %2195 = vmatpush1.bf16.msra.mxu0 0
  %2196 = vmatprep.subr.bf16.mxu0 0
  %2197 = vmatpush1.bf16.msra.mxu0 0
  %2198 = vmatprep.subr.bf16.mxu0 0
  %2199 = vmatpush1.bf16.msra.mxu0 0
  %2200 = vmatprep.subr.bf16.mxu0 0
  %2201 = vmatpush1.bf16.msra.mxu0 0
  %2202 = vmatprep.subr.bf16.mxu0 0
  %2203 = vmatpush1.bf16.msra.mxu0 0
  %2204 = vmatprep.subr.bf16.mxu0 0
  %2205 = vmatpush1.bf16.msra.mxu0 0
  %2206 = vmatprep.subr.bf16.mxu0 0
  %2207 = vmatpush1.bf16.msra.mxu0 0
  %2208 = vmatprep.mubr.bf16.mxu0 0
  %2209 = vmatmul.mubr.bf16.gmra.mrb[0].mxu0 %v1264
  %v2210 = vpop.f32.mrb[0].mxu0
  %v2211 = vadd.f32 %v345, %v2210
  %v2212 = vpop.f32.mrb[0].mxu0
  %v2213 = vadd.f32 %v349, %v2212
  %v2214 = vpop.f32.mrb[0].mxu0
  %v2215 = vpop.f32.mrb[0].mxu0
  %2216 = vdwg.mxu0
  %2217 = vmatprep.subr.bf16.mxu0 %v1021
  %2218 = vmatpush1.bf16.msra.mxu0 %v1020
  %2219 = vmatprep.subr.bf16.mxu0 %v1077
  %2220 = vmatpush1.bf16.msra.mxu0 %v1076
  %2221 = vmatprep.subr.bf16.mxu0 %v1388
  %2222 = vmatpush1.bf16.msra.mxu0 %v1385
  %2223 = vmatprep.subr.bf16.mxu0 0
  %2224 = vmatpush1.bf16.msra.mxu0 0
  %2225 = vmatprep.subr.bf16.mxu0 0
  %2226 = vmatpush1.bf16.msra.mxu0 0
  %2227 = vmatprep.subr.bf16.mxu0 0
  %2228 = vmatpush1.bf16.msra.mxu0 0
  %2229 = vmatprep.subr.bf16.mxu0 0
  %2230 = vmatpush1.bf16.msra.mxu0 0
  %2231 = vmatprep.subr.bf16.mxu0 0
  %2232 = vmatpush1.bf16.msra.mxu0 0
  %2233 = vmatprep.subr.bf16.mxu0 0
  %2234 = vmatpush1.bf16.msra.mxu0 0
  %2235 = vmatprep.subr.bf16.mxu0 0
  %2236 = vmatpush1.bf16.msra.mxu0 0
  %2237 = vmatprep.subr.bf16.mxu0 0
  %2238 = vmatpush1.bf16.msra.mxu0 0
  %2239 = vmatprep.subr.bf16.mxu0 0
  %2240 = vmatpush1.bf16.msra.mxu0 0
  %2241 = vmatprep.subr.bf16.mxu0 0
  %2242 = vmatpush1.bf16.msra.mxu0 0
  %2243 = vmatprep.subr.bf16.mxu0 0
  %2244 = vmatpush1.bf16.msra.mxu0 0
  %2245 = vmatprep.subr.bf16.mxu0 0
  %2246 = vmatpush1.bf16.msra.mxu0 0
  %2247 = vmatprep.subr.bf16.mxu0 0
  %2248 = vmatpush1.bf16.msra.mxu0 0
  %2249 = vmatprep.mubr.bf16.mxu0 0
  %2250 = vmatmul.mubr.bf16.gmra.mrb[0].mxu0 %v1264
  %v2251 = vpop.f32.mrb[0].mxu0
  %v2252 = vadd.f32 %v353, %v2251
  %v2253 = vpop.f32.mrb[0].mxu0
  %v2254 = vadd.f32 %v357, %v2253
  %v2255 = vpop.f32.mrb[0].mxu0
  %v2256 = vpop.f32.mrb[0].mxu0
  %2257 = vdwg.mxu0
  %2258 = vmatprep.subr.bf16.mxu0 %v1023
  %2259 = vmatpush1.bf16.msra.mxu0 %v1022
  %2260 = vmatprep.subr.bf16.mxu0 %v1079
  %2261 = vmatpush1.bf16.msra.mxu0 %v1078
  %2262 = vmatprep.subr.bf16.mxu0 %v1394
  %2263 = vmatpush1.bf16.msra.mxu0 %v1391
  %2264 = vmatprep.subr.bf16.mxu0 0
  %2265 = vmatpush1.bf16.msra.mxu0 0
  %2266 = vmatprep.subr.bf16.mxu0 0
  %2267 = vmatpush1.bf16.msra.mxu0 0
  %2268 = vmatprep.subr.bf16.mxu0 0
  %2269 = vmatpush1.bf16.msra.mxu0 0
  %2270 = vmatprep.subr.bf16.mxu0 0
  %2271 = vmatpush1.bf16.msra.mxu0 0
  %2272 = vmatprep.subr.bf16.mxu0 0
  %2273 = vmatpush1.bf16.msra.mxu0 0
  %2274 = vmatprep.subr.bf16.mxu0 0
  %2275 = vmatpush1.bf16.msra.mxu0 0
  %2276 = vmatprep.subr.bf16.mxu0 0
  %2277 = vmatpush1.bf16.msra.mxu0 0
  %2278 = vmatprep.subr.bf16.mxu0 0
  %2279 = vmatpush1.bf16.msra.mxu0 0
  %2280 = vmatprep.subr.bf16.mxu0 0
  %2281 = vmatpush1.bf16.msra.mxu0 0
  %2282 = vmatprep.subr.bf16.mxu0 0
  %2283 = vmatpush1.bf16.msra.mxu0 0
  %2284 = vmatprep.subr.bf16.mxu0 0
  %2285 = vmatpush1.bf16.msra.mxu0 0
  %2286 = vmatprep.subr.bf16.mxu0 0
  %2287 = vmatpush1.bf16.msra.mxu0 0
  %2288 = vmatprep.subr.bf16.mxu0 0
  %2289 = vmatpush1.bf16.msra.mxu0 0
  %2290 = vmatprep.mubr.bf16.mxu0 0
  %2291 = vmatmul.mubr.bf16.gmra.mrb[0].mxu0 %v1264
  %v2292 = vpop.f32.mrb[0].mxu0
  %v2293 = vadd.f32 %v361, %v2292
  %v2294 = vpop.f32.mrb[0].mxu0
  %v2295 = vadd.f32 %v365, %v2294
  %v2296 = vpop.f32.mrb[0].mxu0
  %v2297 = vpop.f32.mrb[0].mxu0
  %2298 = vdwg.mxu0
  %2299 = vmatprep.subr.bf16.mxu0 %v1025
  %2300 = vmatpush1.bf16.msra.mxu0 %v1024
  %2301 = vmatprep.subr.bf16.mxu0 %v1081
  %2302 = vmatpush1.bf16.msra.mxu0 %v1080
  %2303 = vmatprep.subr.bf16.mxu0 %v1400
  %2304 = vmatpush1.bf16.msra.mxu0 %v1397
  %2305 = vmatprep.subr.bf16.mxu0 0
  %2306 = vmatpush1.bf16.msra.mxu0 0
  %2307 = vmatprep.subr.bf16.mxu0 0
  %2308 = vmatpush1.bf16.msra.mxu0 0
  %2309 = vmatprep.subr.bf16.mxu0 0
  %2310 = vmatpush1.bf16.msra.mxu0 0
  %2311 = vmatprep.subr.bf16.mxu0 0
  %2312 = vmatpush1.bf16.msra.mxu0 0
  %2313 = vmatprep.subr.bf16.mxu0 0
  %2314 = vmatpush1.bf16.msra.mxu0 0
  %2315 = vmatprep.subr.bf16.mxu0 0
  %2316 = vmatpush1.bf16.msra.mxu0 0
  %2317 = vmatprep.subr.bf16.mxu0 0
  %2318 = vmatpush1.bf16.msra.mxu0 0
  %2319 = vmatprep.subr.bf16.mxu0 0
  %2320 = vmatpush1.bf16.msra.mxu0 0
  %2321 = vmatprep.subr.bf16.mxu0 0
  %2322 = vmatpush1.bf16.msra.mxu0 0
  %2323 = vmatprep.subr.bf16.mxu0 0
  %2324 = vmatpush1.bf16.msra.mxu0 0
  %2325 = vmatprep.subr.bf16.mxu0 0
  %2326 = vmatpush1.bf16.msra.mxu0 0
  %2327 = vmatprep.subr.bf16.mxu0 0
  %2328 = vmatpush1.bf16.msra.mxu0 0
  %2329 = vmatprep.subr.bf16.mxu0 0
  %2330 = vmatpush1.bf16.msra.mxu0 0
  %2331 = vmatprep.mubr.bf16.mxu0 0
  %2332 = vmatmul.mubr.bf16.gmra.mrb[0].mxu0 %v1264
  %v2333 = vpop.f32.mrb[0].mxu0
  %v2334 = vadd.f32 %v369, %v2333
  %v2335 = vpop.f32.mrb[0].mxu0
  %v2336 = vadd.f32 %v373, %v2335
  %v2337 = vpop.f32.mrb[0].mxu0
  %v2338 = vpop.f32.mrb[0].mxu0
  %2339 = vdwg.mxu0
  %2340 = vmatprep.subr.bf16.mxu0 %v1027
  %2341 = vmatpush1.bf16.msra.mxu0 %v1026
  %2342 = vmatprep.subr.bf16.mxu0 %v1083
  %2343 = vmatpush1.bf16.msra.mxu0 %v1082
  %2344 = vmatprep.subr.bf16.mxu0 %v1406
  %2345 = vmatpush1.bf16.msra.mxu0 %v1403
  %2346 = vmatprep.subr.bf16.mxu0 0
  %2347 = vmatpush1.bf16.msra.mxu0 0
  %2348 = vmatprep.subr.bf16.mxu0 0
  %2349 = vmatpush1.bf16.msra.mxu0 0
  %2350 = vmatprep.subr.bf16.mxu0 0
  %2351 = vmatpush1.bf16.msra.mxu0 0
  %2352 = vmatprep.subr.bf16.mxu0 0
  %2353 = vmatpush1.bf16.msra.mxu0 0
  %2354 = vmatprep.subr.bf16.mxu0 0
  %2355 = vmatpush1.bf16.msra.mxu0 0
  %2356 = vmatprep.subr.bf16.mxu0 0
  %2357 = vmatpush1.bf16.msra.mxu0 0
  %2358 = vmatprep.subr.bf16.mxu0 0
  %2359 = vmatpush1.bf16.msra.mxu0 0
  %2360 = vmatprep.subr.bf16.mxu0 0
  %2361 = vmatpush1.bf16.msra.mxu0 0
  %2362 = vmatprep.subr.bf16.mxu0 0
  %2363 = vmatpush1.bf16.msra.mxu0 0
  %2364 = vmatprep.subr.bf16.mxu0 0
  %2365 = vmatpush1.bf16.msra.mxu0 0
  %2366 = vmatprep.subr.bf16.mxu0 0
  %2367 = vmatpush1.bf16.msra.mxu0 0
  %2368 = vmatprep.subr.bf16.mxu0 0
  %2369 = vmatpush1.bf16.msra.mxu0 0
  %2370 = vmatprep.subr.bf16.mxu0 0
  %2371 = vmatpush1.bf16.msra.mxu0 0
  %2372 = vmatprep.mubr.bf16.mxu0 0
  %2373 = vmatmul.mubr.bf16.gmra.mrb[0].mxu0 %v1264
  %v2374 = vpop.f32.mrb[0].mxu0
  %v2375 = vadd.f32 %v377, %v2374
  %v2376 = vpop.f32.mrb[0].mxu0
  %v2377 = vadd.f32 %v381, %v2376
  %v2378 = vpop.f32.mrb[0].mxu0
  %v2379 = vpop.f32.mrb[0].mxu0
  %2380 = vdwg.mxu0
  %2381 = vmatprep.subr.bf16.mxu0 %v1029
  %2382 = vmatpush1.bf16.msra.mxu0 %v1028
  %2383 = vmatprep.subr.bf16.mxu0 %v1085
  %2384 = vmatpush1.bf16.msra.mxu0 %v1084
  %2385 = vmatprep.subr.bf16.mxu0 %v1412
  %2386 = vmatpush1.bf16.msra.mxu0 %v1409
  %2387 = vmatprep.subr.bf16.mxu0 0
  %2388 = vmatpush1.bf16.msra.mxu0 0
  %2389 = vmatprep.subr.bf16.mxu0 0
  %2390 = vmatpush1.bf16.msra.mxu0 0
  %2391 = vmatprep.subr.bf16.mxu0 0
  %2392 = vmatpush1.bf16.msra.mxu0 0
  %2393 = vmatprep.subr.bf16.mxu0 0
  %2394 = vmatpush1.bf16.msra.mxu0 0
  %2395 = vmatprep.subr.bf16.mxu0 0
  %2396 = vmatpush1.bf16.msra.mxu0 0
  %2397 = vmatprep.subr.bf16.mxu0 0
  %2398 = vmatpush1.bf16.msra.mxu0 0
  %2399 = vmatprep.subr.bf16.mxu0 0
  %2400 = vmatpush1.bf16.msra.mxu0 0
  %2401 = vmatprep.subr.bf16.mxu0 0
  %2402 = vmatpush1.bf16.msra.mxu0 0
  %2403 = vmatprep.subr.bf16.mxu0 0
  %2404 = vmatpush1.bf16.msra.mxu0 0
  %2405 = vmatprep.subr.bf16.mxu0 0
  %2406 = vmatpush1.bf16.msra.mxu0 0
  %2407 = vmatprep.subr.bf16.mxu0 0
  %2408 = vmatpush1.bf16.msra.mxu0 0
  %2409 = vmatprep.subr.bf16.mxu0 0
  %2410 = vmatpush1.bf16.msra.mxu0 0
  %2411 = vmatprep.subr.bf16.mxu0 0
  %2412 = vmatpush1.bf16.msra.mxu0 0
  %2413 = vmatprep.mubr.bf16.mxu0 0
  %2414 = vmatmul.mubr.bf16.gmra.mrb[0].mxu0 %v1264
  %v2415 = vpop.f32.mrb[0].mxu0
  %v2416 = vadd.f32 %v385, %v2415
  %v2417 = vpop.f32.mrb[0].mxu0
  %v2418 = vadd.f32 %v389, %v2417
  %v2419 = vpop.f32.mrb[0].mxu0
  %v2420 = vpop.f32.mrb[0].mxu0
  %2421 = vdwg.mxu0
  %2422 = vmatprep.subr.bf16.mxu0 %v1031
  %2423 = vmatpush1.bf16.msra.mxu0 %v1030
  %2424 = vmatprep.subr.bf16.mxu0 %v1087
  %2425 = vmatpush1.bf16.msra.mxu0 %v1086
  %2426 = vmatprep.subr.bf16.mxu0 %v1418
  %2427 = vmatpush1.bf16.msra.mxu0 %v1415
  %2428 = vmatprep.subr.bf16.mxu0 0
  %2429 = vmatpush1.bf16.msra.mxu0 0
  %2430 = vmatprep.subr.bf16.mxu0 0
  %2431 = vmatpush1.bf16.msra.mxu0 0
  %2432 = vmatprep.subr.bf16.mxu0 0
  %2433 = vmatpush1.bf16.msra.mxu0 0
  %2434 = vmatprep.subr.bf16.mxu0 0
  %2435 = vmatpush1.bf16.msra.mxu0 0
  %2436 = vmatprep.subr.bf16.mxu0 0
  %2437 = vmatpush1.bf16.msra.mxu0 0
  %2438 = vmatprep.subr.bf16.mxu0 0
  %2439 = vmatpush1.bf16.msra.mxu0 0
  %2440 = vmatprep.subr.bf16.mxu0 0
  %2441 = vmatpush1.bf16.msra.mxu0 0
  %2442 = vmatprep.subr.bf16.mxu0 0
  %2443 = vmatpush1.bf16.msra.mxu0 0
  %2444 = vmatprep.subr.bf16.mxu0 0
  %2445 = vmatpush1.bf16.msra.mxu0 0
  %2446 = vmatprep.subr.bf16.mxu0 0
  %2447 = vmatpush1.bf16.msra.mxu0 0
  %2448 = vmatprep.subr.bf16.mxu0 0
  %2449 = vmatpush1.bf16.msra.mxu0 0
  %2450 = vmatprep.subr.bf16.mxu0 0
  %2451 = vmatpush1.bf16.msra.mxu0 0
  %2452 = vmatprep.subr.bf16.mxu0 0
  %2453 = vmatpush1.bf16.msra.mxu0 0
  %2454 = vmatprep.mubr.bf16.mxu0 0
  %2455 = vmatmul.mubr.bf16.gmra.mrb[0].mxu0 %v1264
  %v2456 = vpop.f32.mrb[0].mxu0
  %v2457 = vadd.f32 %v393, %v2456
  %v2458 = vpop.f32.mrb[0].mxu0
  %v2459 = vadd.f32 %v397, %v2458
  %v2460 = vpop.f32.mrb[0].mxu0
  %v2461 = vpop.f32.mrb[0].mxu0
  %2462 = vdwg.mxu0
  %2463 = vmatprep.subr.bf16.mxu0 %v1033
  %2464 = vmatpush1.bf16.msra.mxu0 %v1032
  %2465 = vmatprep.subr.bf16.mxu0 %v1089
  %2466 = vmatpush1.bf16.msra.mxu0 %v1088
  %2467 = vmatprep.subr.bf16.mxu0 %v1424
  %2468 = vmatpush1.bf16.msra.mxu0 %v1421
  %2469 = vmatprep.subr.bf16.mxu0 0
  %2470 = vmatpush1.bf16.msra.mxu0 0
  %2471 = vmatprep.subr.bf16.mxu0 0
  %2472 = vmatpush1.bf16.msra.mxu0 0
  %2473 = vmatprep.subr.bf16.mxu0 0
  %2474 = vmatpush1.bf16.msra.mxu0 0
  %2475 = vmatprep.subr.bf16.mxu0 0
  %2476 = vmatpush1.bf16.msra.mxu0 0
  %2477 = vmatprep.subr.bf16.mxu0 0
  %2478 = vmatpush1.bf16.msra.mxu0 0
  %2479 = vmatprep.subr.bf16.mxu0 0
  %2480 = vmatpush1.bf16.msra.mxu0 0
  %2481 = vmatprep.subr.bf16.mxu0 0
  %2482 = vmatpush1.bf16.msra.mxu0 0
  %2483 = vmatprep.subr.bf16.mxu0 0
  %2484 = vmatpush1.bf16.msra.mxu0 0
  %2485 = vmatprep.subr.bf16.mxu0 0
  %2486 = vmatpush1.bf16.msra.mxu0 0
  %2487 = vmatprep.subr.bf16.mxu0 0
  %2488 = vmatpush1.bf16.msra.mxu0 0
  %2489 = vmatprep.subr.bf16.mxu0 0
  %2490 = vmatpush1.bf16.msra.mxu0 0
  %2491 = vmatprep.subr.bf16.mxu0 0
  %2492 = vmatpush1.bf16.msra.mxu0 0
  %2493 = vmatprep.subr.bf16.mxu0 0
  %2494 = vmatpush1.bf16.msra.mxu0 0
  %2495 = vmatprep.mubr.bf16.mxu0 0
  %2496 = vmatmul.mubr.bf16.gmra.mrb[0].mxu0 %v1264
  %v2497 = vpop.f32.mrb[0].mxu0
  %v2498 = vadd.f32 %v401, %v2497
  %v2499 = vpop.f32.mrb[0].mxu0
  %v2500 = vadd.f32 %v405, %v2499
  %v2501 = vpop.f32.mrb[0].mxu0
  %v2502 = vpop.f32.mrb[0].mxu0
  %2503 = vdwg.mxu0
  %2504 = vmatprep.subr.bf16.mxu0 %v1035
  %2505 = vmatpush1.bf16.msra.mxu0 %v1034
  %2506 = vmatprep.subr.bf16.mxu0 %v1091
  %2507 = vmatpush1.bf16.msra.mxu0 %v1090
  %2508 = vmatprep.subr.bf16.mxu0 %v1430
  %2509 = vmatpush1.bf16.msra.mxu0 %v1427
  %2510 = vmatprep.subr.bf16.mxu0 0
  %2511 = vmatpush1.bf16.msra.mxu0 0
  %2512 = vmatprep.subr.bf16.mxu0 0
  %2513 = vmatpush1.bf16.msra.mxu0 0
  %2514 = vmatprep.subr.bf16.mxu0 0
  %2515 = vmatpush1.bf16.msra.mxu0 0
  %2516 = vmatprep.subr.bf16.mxu0 0
  %2517 = vmatpush1.bf16.msra.mxu0 0
  %2518 = vmatprep.subr.bf16.mxu0 0
  %2519 = vmatpush1.bf16.msra.mxu0 0
  %2520 = vmatprep.subr.bf16.mxu0 0
  %2521 = vmatpush1.bf16.msra.mxu0 0
  %2522 = vmatprep.subr.bf16.mxu0 0
  %2523 = vmatpush1.bf16.msra.mxu0 0
  %2524 = vmatprep.subr.bf16.mxu0 0
  %2525 = vmatpush1.bf16.msra.mxu0 0
  %2526 = vmatprep.subr.bf16.mxu0 0
  %2527 = vmatpush1.bf16.msra.mxu0 0
  %2528 = vmatprep.subr.bf16.mxu0 0
  %2529 = vmatpush1.bf16.msra.mxu0 0
  %2530 = vmatprep.subr.bf16.mxu0 0
  %2531 = vmatpush1.bf16.msra.mxu0 0
  %2532 = vmatprep.subr.bf16.mxu0 0
  %2533 = vmatpush1.bf16.msra.mxu0 0
  %2534 = vmatprep.subr.bf16.mxu0 0
  %2535 = vmatpush1.bf16.msra.mxu0 0
  %2536 = vmatprep.mubr.bf16.mxu0 0
  %2537 = vmatmul.mubr.bf16.gmra.mrb[0].mxu0 %v1264
  %v2538 = vpop.f32.mrb[0].mxu0
  %v2539 = vadd.f32 %v409, %v2538
  %v2540 = vpop.f32.mrb[0].mxu0
  %v2541 = vadd.f32 %v413, %v2540
  %v2542 = vpop.f32.mrb[0].mxu0
  %v2543 = vpop.f32.mrb[0].mxu0
  %2544 = vdwg.mxu0
  %2545 = vmatprep.subr.bf16.mxu0 %v1037
  %2546 = vmatpush1.bf16.msra.mxu0 %v1036
  %2547 = vmatprep.subr.bf16.mxu0 %v1093
  %2548 = vmatpush1.bf16.msra.mxu0 %v1092
  %2549 = vmatprep.subr.bf16.mxu0 %v1436
  %2550 = vmatpush1.bf16.msra.mxu0 %v1433
  %2551 = vmatprep.subr.bf16.mxu0 0
  %2552 = vmatpush1.bf16.msra.mxu0 0
  %2553 = vmatprep.subr.bf16.mxu0 0
  %2554 = vmatpush1.bf16.msra.mxu0 0
  %2555 = vmatprep.subr.bf16.mxu0 0
  %2556 = vmatpush1.bf16.msra.mxu0 0
  %2557 = vmatprep.subr.bf16.mxu0 0
  %2558 = vmatpush1.bf16.msra.mxu0 0
  %2559 = vmatprep.subr.bf16.mxu0 0
  %2560 = vmatpush1.bf16.msra.mxu0 0
  %2561 = vmatprep.subr.bf16.mxu0 0
  %2562 = vmatpush1.bf16.msra.mxu0 0
  %2563 = vmatprep.subr.bf16.mxu0 0
  %2564 = vmatpush1.bf16.msra.mxu0 0
  %2565 = vmatprep.subr.bf16.mxu0 0
  %2566 = vmatpush1.bf16.msra.mxu0 0
  %2567 = vmatprep.subr.bf16.mxu0 0
  %2568 = vmatpush1.bf16.msra.mxu0 0
  %2569 = vmatprep.subr.bf16.mxu0 0
  %2570 = vmatpush1.bf16.msra.mxu0 0
  %2571 = vmatprep.subr.bf16.mxu0 0
  %2572 = vmatpush1.bf16.msra.mxu0 0
  %2573 = vmatprep.subr.bf16.mxu0 0
  %2574 = vmatpush1.bf16.msra.mxu0 0
  %2575 = vmatprep.subr.bf16.mxu0 0
  %2576 = vmatpush1.bf16.msra.mxu0 0
  %2577 = vmatprep.mubr.bf16.mxu0 0
  %2578 = vmatmul.mubr.bf16.gmra.mrb[0].mxu0 %v1264
  %v2579 = vpop.f32.mrb[0].mxu0
  %v2580 = vadd.f32 %v417, %v2579
  %v2581 = vpop.f32.mrb[0].mxu0
  %v2582 = vadd.f32 %v421, %v2581
  %v2583 = vpop.f32.mrb[0].mxu0
  %v2584 = vpop.f32.mrb[0].mxu0
  %2585 = vdwg.mxu0
  %v2586 = vmax.f32 %v1473, 1.0416
  %v2587 = vmax.f32 %v1475, 1.0416
  %v2588 = vmax.f32 %v1514, 1.0416
  %v2589 = vmax.f32 %v1516, 1.0416
  %v2590 = vmax.f32 %v1555, 1.0416
  %v2591 = vmax.f32 %v1557, 1.0416
  %v2592 = vmax.f32 %v1596, 1.0416
  %v2593 = vmax.f32 %v1598, 1.0416
  %v2594 = vmax.f32 %v1637, 1.0416
  %v2595 = vmax.f32 %v1639, 1.0416
  %v2596 = vmax.f32 %v1678, 1.0416
  %v2597 = vmax.f32 %v1680, 1.0416
  %v2598 = vmax.f32 %v1719, 1.0416
  %v2599 = vmax.f32 %v1721, 1.0416
  %v2600 = vmax.f32 %v1760, 1.0416
  %v2601 = vmax.f32 %v1762, 1.0416
  %v2602 = vmax.f32 %v1801, 1.0416
  %v2603 = vmax.f32 %v1803, 1.0416
  %v2604 = vmax.f32 %v1842, 1.0416
  %v2605 = vmax.f32 %v1844, 1.0416
  %v2606 = vmax.f32 %v1883, 1.0416
  %v2607 = vmax.f32 %v1885, 1.0416
  %v2608 = vmax.f32 %v1924, 1.0416
  %v2609 = vmax.f32 %v1926, 1.0416
  %v2610 = vmax.f32 %v1965, 1.0416
  %v2611 = vmax.f32 %v1967, 1.0416
  %v2612 = vmax.f32 %v2006, 1.0416
  %v2613 = vmax.f32 %v2008, 1.0416
  %v2614 = vmax.f32 %v2047, 1.0416
  %v2615 = vmax.f32 %v2049, 1.0416
  %v2616 = vmax.f32 %v2088, 1.0416
  %v2617 = vmax.f32 %v2090, 1.0416
  %v2618 = vmax.f32 %v2129, 1.0416
  %v2619 = vmax.f32 %v2131, 1.0416
  %v2620 = vmax.f32 %v2170, 1.0416
  %v2621 = vmax.f32 %v2172, 1.0416
  %v2622 = vmax.f32 %v2211, 1.0416
  %v2623 = vmax.f32 %v2213, 1.0416
  %v2624 = vmax.f32 %v2252, 1.0416
  %v2625 = vmax.f32 %v2254, 1.0416
  %v2626 = vmax.f32 %v2293, 1.0416
  %v2627 = vmax.f32 %v2295, 1.0416
  %v2628 = vmax.f32 %v2334, 1.0416
  %v2629 = vmax.f32 %v2336, 1.0416
  %v2630 = vmax.f32 %v2375, 1.0416
  %v2631 = vmax.f32 %v2377, 1.0416
  %v2632 = vmax.f32 %v2416, 1.0416
  %v2633 = vmax.f32 %v2418, 1.0416
  %v2634 = vmax.f32 %v2457, 1.0416
  %v2635 = vmax.f32 %v2459, 1.0416
  %v2636 = vmax.f32 %v2498, 1.0416
  %v2637 = vmax.f32 %v2500, 1.0416
  %v2638 = vmax.f32 %v2539, 1.0416
  %v2639 = vmax.f32 %v2541, 1.0416
  %v2640 = vmax.f32 %v2580, 1.0416
  %v2641 = vmax.f32 %v2582, 1.0416
  %v2642 = vmin.f32 %v2586, 2.7782
  %v2643 = vmin.f32 %v2587, 2.7782
  %v2644 = vmin.f32 %v2588, 2.7782
  %v2645 = vmin.f32 %v2589, 2.7782
  %v2646 = vmin.f32 %v2590, 2.7782
  %v2647 = vmin.f32 %v2591, 2.7782
  %v2648 = vmin.f32 %v2592, 2.7782
  %v2649 = vmin.f32 %v2593, 2.7782
  %v2650 = vmin.f32 %v2594, 2.7782
  %v2651 = vmin.f32 %v2595, 2.7782
  %v2652 = vmin.f32 %v2596, 2.7782
  %v2653 = vmin.f32 %v2597, 2.7782
  %v2654 = vmin.f32 %v2598, 2.7782
  %v2655 = vmin.f32 %v2599, 2.7782
  %v2656 = vmin.f32 %v2600, 2.7782
  %v2657 = vmin.f32 %v2601, 2.7782
  %v2658 = vmin.f32 %v2602, 2.7782
  %v2659 = vmin.f32 %v2603, 2.7782
  %v2660 = vmin.f32 %v2604, 2.7782
  %v2661 = vmin.f32 %v2605, 2.7782
  %v2662 = vmin.f32 %v2606, 2.7782
  %v2663 = vmin.f32 %v2607, 2.7782
  %v2664 = vmin.f32 %v2608, 2.7782
  %v2665 = vmin.f32 %v2609, 2.7782
  %v2666 = vmin.f32 %v2610, 2.7782
  %v2667 = vmin.f32 %v2611, 2.7782
  %v2668 = vmin.f32 %v2612, 2.7782
  %v2669 = vmin.f32 %v2613, 2.7782
  %v2670 = vmin.f32 %v2614, 2.7782
  %v2671 = vmin.f32 %v2615, 2.7782
  %v2672 = vmin.f32 %v2616, 2.7782
  %v2673 = vmin.f32 %v2617, 2.7782
  %v2674 = vmin.f32 %v2618, 2.7782
  %v2675 = vmin.f32 %v2619, 2.7782
  %v2676 = vmin.f32 %v2620, 2.7782
  %v2677 = vmin.f32 %v2621, 2.7782
  %v2678 = vmin.f32 %v2622, 2.7782
  %v2679 = vmin.f32 %v2623, 2.7782
  %v2680 = vmin.f32 %v2624, 2.7782
  %v2681 = vmin.f32 %v2625, 2.7782
  %v2682 = vmin.f32 %v2626, 2.7782
  %v2683 = vmin.f32 %v2627, 2.7782
  %v2684 = vmin.f32 %v2628, 2.7782
  %v2685 = vmin.f32 %v2629, 2.7782
  %v2686 = vmin.f32 %v2630, 2.7782
  %v2687 = vmin.f32 %v2631, 2.7782
  %v2688 = vmin.f32 %v2632, 2.7782
  %v2689 = vmin.f32 %v2633, 2.7782
  %v2690 = vmin.f32 %v2634, 2.7782
  %v2691 = vmin.f32 %v2635, 2.7782
  %v2692 = vmin.f32 %v2636, 2.7782
  %v2693 = vmin.f32 %v2637, 2.7782
  %v2694 = vmin.f32 %v2638, 2.7782
  %v2695 = vmin.f32 %v2639, 2.7782
  %v2696 = vmin.f32 %v2640, 2.7782
  %v2697 = vmin.f32 %v2641, 2.7782
  %2698 = vst [vmem:[%s3] sm:$0xff] %v2642
  %2699 = vst [vmem:[%s3 + $0x8] sm:$0xff] %v2643
  %2700 = vst [vmem:[%s3 + $0x10] sm:$0xff] %v2644
  %2701 = vst [vmem:[%s3 + $0x18] sm:$0xff] %v2645
  %2702 = vst [vmem:[%s3 + $0x20] sm:$0xff] %v2646
  %2703 = vst [vmem:[%s3 + $0x28] sm:$0xff] %v2647
  %2704 = vst [vmem:[%s3 + $0x30] sm:$0xff] %v2648
  %2705 = vst [vmem:[%s3 + $0x38] sm:$0xff] %v2649
  %2706 = vst [vmem:[%s3 + $0x40] sm:$0xff] %v2650
  %2707 = vst [vmem:[%s3 + $0x48] sm:$0xff] %v2651
  %2708 = vst [vmem:[%s3 + $0x50] sm:$0xff] %v2652
  %2709 = vst [vmem:[%s3 + $0x58] sm:$0xff] %v2653
  %2710 = vst [vmem:[%s3 + $0x60] sm:$0xff] %v2654
  %2711 = vst [vmem:[%s3 + $0x68] sm:$0xff] %v2655
  %2712 = vst [vmem:[%s3 + $0x70] sm:$0xff] %v2656
  %2713 = vst [vmem:[%s3 + $0x78] sm:$0xff] %v2657
  %2714 = vst [vmem:[%s3 + $0x80] sm:$0xff] %v2658
  %2715 = vst [vmem:[%s3 + $0x88] sm:$0xff] %v2659
  %2716 = vst [vmem:[%s3 + $0x90] sm:$0xff] %v2660
  %2717 = vst [vmem:[%s3 + $0x98] sm:$0xff] %v2661
  %2718 = vst [vmem:[%s3 + $0xa0] sm:$0xff] %v2662
  %2719 = vst [vmem:[%s3 + $0xa8] sm:$0xff] %v2663
  %2720 = vst [vmem:[%s3 + $0xb0] sm:$0xff] %v2664
  %2721 = vst [vmem:[%s3 + $0xb8] sm:$0xff] %v2665
  %2722 = vst [vmem:[%s3 + $0xc0] sm:$0xff] %v2666
  %2723 = vst [vmem:[%s3 + $0xc8] sm:$0xff] %v2667
  %2724 = vst [vmem:[%s3 + $0xd0] sm:$0xff] %v2668
  %2725 = vst [vmem:[%s3 + $0xd8] sm:$0xff] %v2669
  %2726 = vst [vmem:[%s3 + $0xe0] sm:$0xff] %v2670
  %2727 = vst [vmem:[%s3 + $0xe8] sm:$0xff] %v2671
  %2728 = vst [vmem:[%s3 + $0xf0] sm:$0xff] %v2672
  %2729 = vst [vmem:[%s3 + $0xf8] sm:$0xff] %v2673
  %2730 = vst [vmem:[%s3 + $0x100] sm:$0xff] %v2674
  %2731 = vst [vmem:[%s3 + $0x108] sm:$0xff] %v2675
  %2732 = vst [vmem:[%s3 + $0x110] sm:$0xff] %v2676
  %2733 = vst [vmem:[%s3 + $0x118] sm:$0xff] %v2677
  %2734 = vst [vmem:[%s3 + $0x120] sm:$0xff] %v2678
  %2735 = vst [vmem:[%s3 + $0x128] sm:$0xff] %v2679
  %2736 = vst [vmem:[%s3 + $0x130] sm:$0xff] %v2680
  %2737 = vst [vmem:[%s3 + $0x138] sm:$0xff] %v2681
  %2738 = vst [vmem:[%s3 + $0x140] sm:$0xff] %v2682
  %2739 = vst [vmem:[%s3 + $0x148] sm:$0xff] %v2683
  %2740 = vst [vmem:[%s3 + $0x150] sm:$0xff] %v2684
  %2741 = vst [vmem:[%s3 + $0x158] sm:$0xff] %v2685
  %2742 = vst [vmem:[%s3 + $0x160] sm:$0xff] %v2686
  %2743 = vst [vmem:[%s3 + $0x168] sm:$0xff] %v2687
  %2744 = vst [vmem:[%s3 + $0x170] sm:$0xff] %v2688
  %2745 = vst [vmem:[%s3 + $0x178] sm:$0xff] %v2689
  %2746 = vst [vmem:[%s3 + $0x180] sm:$0xff] %v2690
  %2747 = vst [vmem:[%s3 + $0x188] sm:$0xff] %v2691
  %2748 = vst [vmem:[%s3 + $0x190] sm:$0xff] %v2692
  %2749 = vst [vmem:[%s3 + $0x198] sm:$0xff] %v2693
  %2750 = vst [vmem:[%s3 + $0x1a0] sm:$0xff] %v2694
  %2751 = vst [vmem:[%s3 + $0x1a8] sm:$0xff] %v2695
  %2752 = vst [vmem:[%s3 + $0x1b0] sm:$0xff] %v2696
  %2753 = vst [vmem:[%s3 + $0x1b8] sm:$0xff] %v2697
  // Predicated region
  $region14: #{model_forward.1} parent=0 // pred_check
    _
  $region15: #{model_forward.1} parent=0 // pred_check_branch
    %2755 = sbr.rel (0) target = $region17
  $region16: #{model_forward.1} parent=0 // pred_region
    _
  $region17: #{model_forward.1} parent=0 // pred_fallthru
    _
  // Predicated region
  $region18: #{model_forward.1} parent=0 // pred_check
    _
  $region19: #{model_forward.1} parent=0 // pred_check_branch
    %2757 = sbr.rel (0) target = $region21
  $region20: #{model_forward.1} parent=0 // pred_region
    _
  $region21: #{model_forward.1} parent=0 // pred_fallthru
    _

</llo_original>
